<compile_context>
chip_gen: v7x
topology: tpu7x:2x2x1
jax: 0.10.0
libtpu: 0.0.40
codegen_flags: <defaults>
</compile_context>

<pallas_src>
import jax
import jax.numpy as jnp
from jax.experimental import pallas as pl
from jax.experimental.pallas import tpu as pltpu

NC = 3      # input channels
NDF = 8     # discriminator feature width (small, synthetic)
BATCH = 2
IMG = 64    # spatial size implied by the final 4x4/stride-1/pad-0 conv -> 1x1

_BN_EPS = 1e-5
_LEAKY_SLOPE = 0.2


# ----------------------------- Pallas kernels --------------------------------
def _conv_leaky_kernel(w_ref, p_ref, o_ref):
    """(Cout, K) @ (K, tm) -> (Cout, tm), LeakyReLU(0.2). No BatchNorm."""
    y = jnp.dot(w_ref[...], p_ref[...], preferred_element_type=jnp.float32)
    y = jnp.where(y > 0.0, y, _LEAKY_SLOPE * y)
    o_ref[...] = y.astype(o_ref.dtype)


def _conv_bn_leaky_kernel(w_ref, p_ref, g_ref, b_ref, o_ref):
    """Conv (as matmul) + BatchNorm2d (training stats over M axis) + LeakyReLU."""
    y = jnp.dot(w_ref[...], p_ref[...], preferred_element_type=jnp.float32)
    mean = jnp.mean(y, axis=1, keepdims=True)                      # per channel
    var = jnp.mean(jnp.square(y - mean), axis=1, keepdims=True)    # biased var
    y = (y - mean) * jax.lax.rsqrt(var + _BN_EPS)
    y = y * g_ref[...] + b_ref[...]
    y = jnp.where(y > 0.0, y, _LEAKY_SLOPE * y)
    o_ref[...] = y.astype(o_ref.dtype)


def _conv_bn_leaky_head_kernel(w4_ref, p_ref, g_ref, b_ref, w5_ref, sel_ref, o_ref):
    """Layer 4 (conv+BN+LeakyReLU) fused with layer 5 (4x4 conv -> 1x1 + sigmoid).

    y4:  (C4, B*16)  columns ordered (b, ho, wo), Ho=Wo=4
    w5:  (C4, B*16)  layer-5 weight (C4, 16) tiled across batch along lanes
    sel: (B,  B*16)  0/1 mask selecting the 16 columns belonging to batch b
    out: (B, 1)
    """
    y = jnp.dot(w4_ref[...], p_ref[...], preferred_element_type=jnp.float32)
    mean = jnp.mean(y, axis=1, keepdims=True)
    var = jnp.mean(jnp.square(y - mean), axis=1, keepdims=True)
    y = (y - mean) * jax.lax.rsqrt(var + _BN_EPS)
    y = y * g_ref[...] + b_ref[...]
    y = jnp.where(y > 0.0, y, _LEAKY_SLOPE * y)
    # Layer 5: per-batch Frobenius inner product <w5, a4_b>, then sigmoid.
    z = y * w5_ref[...]                                      # (C4, B*16) f32
    col = jnp.sum(z, axis=0, keepdims=True)                  # (1, B*16) sublane reduce
    logits = jnp.sum(sel_ref[...] * col, axis=1, keepdims=True)   # (B, 1) lane reduce
    o_ref[...] = jax.nn.sigmoid(logits).astype(o_ref.dtype)


# ------------------------------- JAX glue ------------------------------------
def _im2col_cbhw(a_cbhw, ksize, stride, pad, out_dtype):
    """(C,B,H,W) -> (K*K*C, B*Ho*Wo).

    Patch-row order (kh, kw, c) with c fastest; column order (b, ho, wo).
    """
    C, B, H, W = a_cbhw.shape
    ap = jnp.pad(a_cbhw, ((0, 0), (0, 0), (pad, pad), (pad, pad)))
    Ho = (H + 2 * pad - ksize) // stride + 1
    Wo = (W + 2 * pad - ksize) // stride + 1
    # NOTE: for layer 1 this still replicates the input 4x in HBM; at these
    # shapes (<=400 KiB bf16) the cost is negligible vs. launch overhead.
    slabs = [ap[:, :, ki:ki + stride * Ho:stride, kj:kj + stride * Wo:stride]
             for ki in range(ksize) for kj in range(ksize)]
    p = jnp.stack(slabs, axis=0)                       # (K*K, C, B, Ho, Wo)
    p = p.reshape(ksize * ksize * C, B * Ho * Wo)      # no transpose needed
    return p.astype(out_dtype), Ho, Wo


def _flatten_weight(w_oihw, dtype):
    """(Cout, Cin, K, K) -> (Cout, K*K*Cin) in (kh, kw, c) order (matches im2col)."""
    Cout, Cin, K, _ = w_oihw.shape
    return w_oihw.transpose(0, 2, 3, 1).reshape(Cout, K * K * Cin).astype(dtype)


def _conv_leaky(a_cbhw, w_oihw, *, stride, pad, block_m=512):
    """Layer without BatchNorm: tiled over M ('parallel' grid axis)."""
    Cout, Cin, K, _ = w_oihw.shape
    B = a_cbhw.shape[1]
    p, Ho, Wo = _im2col_cbhw(a_cbhw, K, stride, pad, jnp.bfloat16)
    w = _flatten_weight(w_oihw, jnp.bfloat16)
    Kd, M = p.shape
    if block_m is None or M % block_m != 0:
        block_m = M
    out = pl.pallas_call(
        _conv_leaky_kernel,
        out_shape=jax.ShapeDtypeStruct((Cout, M), jnp.bfloat16),
        grid=(M // block_m,),
        in_specs=[
            pl.BlockSpec((Cout, Kd), lambda i: (0, 0)),     # weights stay resident
            pl.BlockSpec((Kd, block_m), lambda i: (0, i)),
        ],
        out_specs=pl.BlockSpec((Cout, block_m), lambda i: (0, i)),
        compiler_params=pltpu.CompilerParams(dimension_semantics=("parallel",)),
    )(w, p)
    return out.reshape(Cout, B, Ho, Wo)


def _conv_bn_leaky(a_cbhw, w_oihw, gamma, beta, *, stride, pad):
    """Layer with BatchNorm: single M block so batch stats are exact."""
    Cout, Cin, K, _ = w_oihw.shape
    B = a_cbhw.shape[1]
    p, Ho, Wo = _im2col_cbhw(a_cbhw, K, stride, pad, jnp.bfloat16)
    w = _flatten_weight(w_oihw, jnp.bfloat16)
    Kd, M = p.shape
    out = pl.pallas_call(
        _conv_bn_leaky_kernel,
        out_shape=jax.ShapeDtypeStruct((Cout, M), jnp.bfloat16),
        grid=(1,),
        in_specs=[
            pl.BlockSpec((Cout, Kd), lambda i: (0, 0)),
            pl.BlockSpec((Kd, M), lambda i: (0, 0)),
            pl.BlockSpec((Cout, 1), lambda i: (0, 0)),
            pl.BlockSpec((Cout, 1), lambda i: (0, 0)),
        ],
        out_specs=pl.BlockSpec((Cout, M), lambda i: (0, 0)),
    )(w, p,
      gamma.reshape(Cout, 1).astype(jnp.float32),
      beta.reshape(Cout, 1).astype(jnp.float32))
    return out.reshape(Cout, B, Ho, Wo)


def _conv_bn_leaky_head(a_cbhw, w4_oihw, gamma, beta, w5_oihw, *, stride, pad):
    """Layer 4 (conv+BN+LeakyReLU) with layer 5 (+sigmoid) fused in the epilogue."""
    Cout, Cin, K, _ = w4_oihw.shape
    B = a_cbhw.shape[1]
    p, Ho, Wo = _im2col_cbhw(a_cbhw, K, stride, pad, jnp.bfloat16)   # (512, B*16)
    w4 = _flatten_weight(w4_oihw, jnp.bfloat16)
    Kd, M = p.shape
    S = Ho * Wo                                        # 16 = layer-5 receptive field
    w5flat = w5_oihw.reshape(Cout, S).astype(jnp.float32)            # (C4, 16)
    w5_tiled = jnp.tile(w5flat, (1, B))                              # (C4, B*16)
    sel = (jnp.arange(B)[:, None] == (jnp.arange(B * S)[None, :] // S))
    sel = sel.astype(jnp.float32)                                    # (B, B*16)
    out = pl.pallas_call(
        _conv_bn_leaky_head_kernel,
        out_shape=jax.ShapeDtypeStruct((B, 1), jnp.float32),
        grid=(1,),
        in_specs=[
            pl.BlockSpec((Cout, Kd), lambda i: (0, 0)),
            pl.BlockSpec((Kd, M), lambda i: (0, 0)),
            pl.BlockSpec((Cout, 1), lambda i: (0, 0)),
            pl.BlockSpec((Cout, 1), lambda i: (0, 0)),
            pl.BlockSpec((Cout, M), lambda i: (0, 0)),
            pl.BlockSpec((B, M), lambda i: (0, 0)),
        ],
        out_specs=pl.BlockSpec((B, 1), lambda i: (0, 0)),
    )(w4, p,
      gamma.reshape(Cout, 1).astype(jnp.float32),
      beta.reshape(Cout, 1).astype(jnp.float32),
      w5_tiled, sel)
    return out   # (B, 1)


# ------------------------------ Model plumbing --------------------------------
def init_params(key, nc=NC, ndf=NDF):
    """Deterministic DCGAN-style init: conv ~ N(0,0.02), BN gamma ~ N(1,0.02)."""
    dims = [(ndf, nc), (ndf * 2, ndf), (ndf * 4, ndf * 2),
            (ndf * 8, ndf * 4), (1, ndf * 8)]
    params = []
    for i, (co, ci) in enumerate(dims):
        key, kw, kg = jax.random.split(key, 3)
        w = 0.02 * jax.random.normal(kw, (co, ci, 4, 4), jnp.float32)
        if 1 <= i <= 3:  # layers with BatchNorm
            gamma = 1.0 + 0.02 * jax.random.normal(kg, (co,), jnp.float32)
            beta = jnp.zeros((co,), jnp.float32)
        else:
            gamma = jnp.ones((co,), jnp.float32)
            beta = jnp.zeros((co,), jnp.float32)
        params.append((w, gamma, beta))
    return params


def discriminator_forward(x_nchw, params):
    (w1, _g1, _b1), (w2, g2, b2), (w3, g3, b3), (w4, g4, b4), (w5, _g5, _b5) = params
    a = jnp.transpose(x_nchw, (1, 0, 2, 3))                 # (C, B, H, W), once
    a = _conv_leaky(a, w1, stride=2, pad=1, block_m=512)    # (ndf,  B, 32, 32)
    a = _conv_bn_leaky(a, w2, g2, b2, stride=2, pad=1)      # (2ndf, B, 16, 16)
    a = _conv_bn_leaky(a, w3, g3, b3, stride=2, pad=1)      # (4ndf, B,  8,  8)
    out = _conv_bn_leaky_head(a, w4, g4, b4, w5, stride=2, pad=1)   # (B, 1)
    return out.reshape(x_nchw.shape[0], 1, 1, 1)


if __name__ == "__main__":
    key = jax.random.PRNGKey(0)
    key_x, key_p = jax.random.split(key)
    x = jax.random.normal(key_x, (BATCH, NC, IMG, IMG), jnp.float32)
    params = init_params(key_p)

    out = jax.jit(discriminator_forward)(x, params)
    out = jax.block_until_ready(out)

    assert out.shape == (BATCH, 1, 1, 1), out.shape
    assert bool(jnp.all((out >= 0.0) & (out <= 1.0)))
    print("KERNEL_OK")
</pallas_src>

<mosaic_0001>
module attributes {stable_mosaic.version = 11 : i64} {
  func.func @_conv_leaky_kernel(%arg0: i32, %arg1: memref<8x48xbf16, #tpu.memory_space<vmem>>, %arg2: memref<48x512xbf16, #tpu.memory_space<vmem>>, %arg3: memref<8x512xbf16, #tpu.memory_space<vmem>>) attributes {dimension_semantics = [#tpu.dimension_semantics<parallel>], iteration_bounds = array<i64: 4>, scalar_prefetch = 0 : i64, scratch_operands = 0 : i64, tpu.core_type = #tpu.core_type<tc>, window_params = [{pipeline_mode = #tpu.pipeline_mode<synchronous>, transform_indices = @transform_0, window_bounds = array<i64: 8, 48>}, {transform_indices = @transform_1, window_bounds = array<i64: 48, 512>}, {transform_indices = @transform_2, window_bounds = array<i64: 8, 512>}]} {
    %c0 = arith.constant 0 : index
    %c0_0 = arith.constant 0 : index
    %0 = vector.load %arg1[%c0, %c0_0] : memref<8x48xbf16, #tpu.memory_space<vmem>>, vector<8x48xbf16>
    %c0_1 = arith.constant 0 : index
    %c0_2 = arith.constant 0 : index
    %1 = vector.load %arg2[%c0_1, %c0_2] : memref<48x512xbf16, #tpu.memory_space<vmem>>, vector<48x512xbf16>
    %cst = arith.constant dense<0.000000e+00> : vector<8x512xf32>
    %2 = tpu.matmul %0, %1, %cst {dimension_numbers = #tpu.dot_dimension_numbers<[1], [0], [0], [1], [0, 0, 1, 1], [], []>} : vector<8x48xbf16>, vector<48x512xbf16>, vector<8x512xf32> -> vector<8x512xf32>
    %cst_3 = arith.constant 0.000000e+00 : f32
    %3 = vector.broadcast %cst_3 : f32 to vector<8x512xf32>
    %4 = arith.cmpf ogt, %2, %3 : vector<8x512xf32>
    %cst_4 = arith.constant 2.000000e-01 : f32
    %5 = vector.broadcast %cst_4 : f32 to vector<8x512xf32>
    %6 = arith.mulf %5, %2 : vector<8x512xf32>
    %7 = arith.select %4, %2, %6 : vector<8x512xi1>, vector<8x512xf32>
    %8 = arith.truncf %7 : vector<8x512xf32> to vector<8x512xbf16>
    %c0_5 = arith.constant 0 : index
    %c0_6 = arith.constant 0 : index
    %9 = vector.load %arg3[%c0_5, %c0_6] : memref<8x512xbf16, #tpu.memory_space<vmem>>, vector<8x512xbf16>
    tpu.vector_store %arg3[%c0_5, %c0_6], %8 {strides = array<i32>} : memref<8x512xbf16, #tpu.memory_space<vmem>>, vector<8x512xbf16>,
    return
  }
  func.func @transform_0(%arg0: i32) -> (i32, i32) {
    %c0_i32 = arith.constant 0 : i32
    %c0_i32_0 = arith.constant 0 : i32
    %c0_i32_1 = arith.constant 0 : i32
    return %c0_i32, %c0_i32_0 : i32, i32
  }
  func.func @transform_1(%arg0: i32) -> (i32, i32) {
    %c0_i32 = arith.constant 0 : i32
    %c0_i32_0 = arith.constant 0 : i32
    return %c0_i32, %arg0 : i32, i32
  }
  func.func @transform_2(%arg0: i32) -> (i32, i32) {
    %c0_i32 = arith.constant 0 : i32
    %c0_i32_0 = arith.constant 0 : i32
    return %c0_i32, %arg0 : i32, i32
  }
}

module attributes {stable_mosaic.version = 11 : i64} {
  func.func @_conv_bn_leaky_kernel(%arg0: i32, %arg1: memref<16x128xbf16, #tpu.memory_space<vmem>>, %arg2: memref<128x512xbf16, #tpu.memory_space<vmem>>, %arg3: memref<16x1xf32, #tpu.memory_space<vmem>>, %arg4: memref<16x1xf32, #tpu.memory_space<vmem>>, %arg5: memref<16x512xbf16, #tpu.memory_space<vmem>>) attributes {dimension_semantics = [#tpu.dimension_semantics<arbitrary>], iteration_bounds = array<i64: 1>, scalar_prefetch = 0 : i64, scratch_operands = 0 : i64, tpu.core_type = #tpu.core_type<tc>, window_params = [{pipeline_mode = #tpu.pipeline_mode<synchronous>, transform_indices = @transform_0, window_bounds = array<i64: 16, 128>}, {pipeline_mode = #tpu.pipeline_mode<synchronous>, transform_indices = @transform_1, window_bounds = array<i64: 128, 512>}, {pipeline_mode = #tpu.pipeline_mode<synchronous>, transform_indices = @transform_2, window_bounds = array<i64: 16, 1>}, {pipeline_mode = #tpu.pipeline_mode<synchronous>, transform_indices = @transform_3, window_bounds = array<i64: 16, 1>}, {pipeline_mode = #tpu.pipeline_mode<synchronous>, transform_indices = @transform_4, window_bounds = array<i64: 16, 512>}]} {
    %c0 = arith.constant 0 : index
    %c0_0 = arith.constant 0 : index
    %0 = vector.load %arg1[%c0, %c0_0] : memref<16x128xbf16, #tpu.memory_space<vmem>>, vector<16x128xbf16>
    %c0_1 = arith.constant 0 : index
    %c0_2 = arith.constant 0 : index
    %1 = vector.load %arg2[%c0_1, %c0_2] : memref<128x512xbf16, #tpu.memory_space<vmem>>, vector<128x512xbf16>
    %cst = arith.constant dense<0.000000e+00> : vector<16x512xf32>
    %2 = tpu.matmul %0, %1, %cst {dimension_numbers = #tpu.dot_dimension_numbers<[1], [0], [0], [1], [0, 0, 1, 1], [], []>} : vector<16x128xbf16>, vector<128x512xbf16>, vector<16x512xf32> -> vector<16x512xf32>
    %cst_3 = arith.constant dense<0.000000e+00> : vector<16xf32>
    %3 = vector.multi_reduction <add>, %2, %cst_3 [1] : vector<16x512xf32> to vector<16xf32>
    %4 = vector.shape_cast %3 : vector<16xf32> to vector<16x1xf32>
    %cst_4 = arith.constant 5.120000e+02 : f32
    %5 = vector.broadcast %cst_4 : f32 to vector<16x1xf32>
    %6 = arith.divf %4, %5 : vector<16x1xf32>
    %7 = vector.broadcast %6 : vector<16x1xf32> to vector<16x512xf32>
    %8 = arith.subf %2, %7 : vector<16x512xf32>
    %9 = arith.mulf %8, %8 : vector<16x512xf32>
    %cst_5 = arith.constant dense<0.000000e+00> : vector<16xf32>
    %10 = vector.multi_reduction <add>, %9, %cst_5 [1] : vector<16x512xf32> to vector<16xf32>
    %11 = vector.shape_cast %10 : vector<16xf32> to vector<16x1xf32>
    %cst_6 = arith.constant 5.120000e+02 : f32
    %12 = vector.broadcast %cst_6 : f32 to vector<16x1xf32>
    %13 = arith.divf %11, %12 : vector<16x1xf32>
    %14 = vector.broadcast %6 : vector<16x1xf32> to vector<16x512xf32>
    %15 = arith.subf %2, %14 : vector<16x512xf32>
    %cst_7 = arith.constant 9.99999974E-6 : f32
    %16 = vector.broadcast %cst_7 : f32 to vector<16x1xf32>
    %17 = arith.addf %13, %16 : vector<16x1xf32>
    %18 = math.rsqrt %17 : vector<16x1xf32>
    %19 = vector.broadcast %18 : vector<16x1xf32> to vector<16x512xf32>
    %20 = arith.mulf %15, %19 : vector<16x512xf32>
    %c0_8 = arith.constant 0 : index
    %c0_9 = arith.constant 0 : index
    %21 = vector.load %arg3[%c0_8, %c0_9] : memref<16x1xf32, #tpu.memory_space<vmem>>, vector<16x1xf32>
    %22 = vector.broadcast %21 : vector<16x1xf32> to vector<16x512xf32>
    %23 = arith.mulf %20, %22 : vector<16x512xf32>
    %c0_10 = arith.constant 0 : index
    %c0_11 = arith.constant 0 : index
    %24 = vector.load %arg4[%c0_10, %c0_11] : memref<16x1xf32, #tpu.memory_space<vmem>>, vector<16x1xf32>
    %25 = vector.broadcast %24 : vector<16x1xf32> to vector<16x512xf32>
    %26 = arith.addf %23, %25 : vector<16x512xf32>
    %cst_12 = arith.constant 0.000000e+00 : f32
    %27 = vector.broadcast %cst_12 : f32 to vector<16x512xf32>
    %28 = arith.cmpf ogt, %26, %27 : vector<16x512xf32>
    %cst_13 = arith.constant 2.000000e-01 : f32
    %29 = vector.broadcast %cst_13 : f32 to vector<16x512xf32>
    %30 = arith.mulf %29, %26 : vector<16x512xf32>
    %31 = arith.select %28, %26, %30 : vector<16x512xi1>, vector<16x512xf32>
    %32 = arith.truncf %31 : vector<16x512xf32> to vector<16x512xbf16>
    %c0_14 = arith.constant 0 : index
    %c0_15 = arith.constant 0 : index
    %33 = vector.load %arg5[%c0_14, %c0_15] : memref<16x512xbf16, #tpu.memory_space<vmem>>, vector<16x512xbf16>
    tpu.vector_store %arg5[%c0_14, %c0_15], %32 {strides = array<i32>} : memref<16x512xbf16, #tpu.memory_space<vmem>>, vector<16x512xbf16>,
    return
  }
  func.func @transform_0(%arg0: i32) -> (i32, i32) {
    %c0_i32 = arith.constant 0 : i32
    %c0_i32_0 = arith.constant 0 : i32
    %c0_i32_1 = arith.constant 0 : i32
    return %c0_i32, %c0_i32_0 : i32, i32
  }
  func.func @transform_1(%arg0: i32) -> (i32, i32) {
    %c0_i32 = arith.constant 0 : i32
    %c0_i32_0 = arith.constant 0 : i32
    %c0_i32_1 = arith.constant 0 : i32
    return %c0_i32, %c0_i32_0 : i32, i32
  }
  func.func @transform_2(%arg0: i32) -> (i32, i32) {
    %c0_i32 = arith.constant 0 : i32
    %c0_i32_0 = arith.constant 0 : i32
    %c0_i32_1 = arith.constant 0 : i32
    return %c0_i32, %c0_i32_0 : i32, i32
  }
  func.func @transform_3(%arg0: i32) -> (i32, i32) {
    %c0_i32 = arith.constant 0 : i32
    %c0_i32_0 = arith.constant 0 : i32
    %c0_i32_1 = arith.constant 0 : i32
    return %c0_i32, %c0_i32_0 : i32, i32
  }
  func.func @transform_4(%arg0: i32) -> (i32, i32) {
    %c0_i32 = arith.constant 0 : i32
    %c0_i32_0 = arith.constant 0 : i32
    %c0_i32_1 = arith.constant 0 : i32
    return %c0_i32, %c0_i32_0 : i32, i32
  }
}

module attributes {stable_mosaic.version = 11 : i64} {
  func.func @_conv_bn_leaky_kernel(%arg0: i32, %arg1: memref<32x256xbf16, #tpu.memory_space<vmem>>, %arg2: memref<256x128xbf16, #tpu.memory_space<vmem>>, %arg3: memref<32x1xf32, #tpu.memory_space<vmem>>, %arg4: memref<32x1xf32, #tpu.memory_space<vmem>>, %arg5: memref<32x128xbf16, #tpu.memory_space<vmem>>) attributes {dimension_semantics = [#tpu.dimension_semantics<arbitrary>], iteration_bounds = array<i64: 1>, scalar_prefetch = 0 : i64, scratch_operands = 0 : i64, tpu.core_type = #tpu.core_type<tc>, window_params = [{pipeline_mode = #tpu.pipeline_mode<synchronous>, transform_indices = @transform_0, window_bounds = array<i64: 32, 256>}, {pipeline_mode = #tpu.pipeline_mode<synchronous>, transform_indices = @transform_1, window_bounds = array<i64: 256, 128>}, {pipeline_mode = #tpu.pipeline_mode<synchronous>, transform_indices = @transform_2, window_bounds = array<i64: 32, 1>}, {pipeline_mode = #tpu.pipeline_mode<synchronous>, transform_indices = @transform_3, window_bounds = array<i64: 32, 1>}, {pipeline_mode = #tpu.pipeline_mode<synchronous>, transform_indices = @transform_4, window_bounds = array<i64: 32, 128>}]} {
    %c0 = arith.constant 0 : index
    %c0_0 = arith.constant 0 : index
    %0 = vector.load %arg1[%c0, %c0_0] : memref<32x256xbf16, #tpu.memory_space<vmem>>, vector<32x256xbf16>
    %c0_1 = arith.constant 0 : index
    %c0_2 = arith.constant 0 : index
    %1 = vector.load %arg2[%c0_1, %c0_2] : memref<256x128xbf16, #tpu.memory_space<vmem>>, vector<256x128xbf16>
    %cst = arith.constant dense<0.000000e+00> : vector<32x128xf32>
    %2 = tpu.matmul %0, %1, %cst {dimension_numbers = #tpu.dot_dimension_numbers<[1], [0], [0], [1], [0, 0, 1, 1], [], []>} : vector<32x256xbf16>, vector<256x128xbf16>, vector<32x128xf32> -> vector<32x128xf32>
    %cst_3 = arith.constant dense<0.000000e+00> : vector<32xf32>
    %3 = vector.multi_reduction <add>, %2, %cst_3 [1] : vector<32x128xf32> to vector<32xf32>
    %4 = vector.shape_cast %3 : vector<32xf32> to vector<32x1xf32>
    %cst_4 = arith.constant 1.280000e+02 : f32
    %5 = vector.broadcast %cst_4 : f32 to vector<32x1xf32>
    %6 = arith.divf %4, %5 : vector<32x1xf32>
    %7 = vector.broadcast %6 : vector<32x1xf32> to vector<32x128xf32>
    %8 = arith.subf %2, %7 : vector<32x128xf32>
    %9 = arith.mulf %8, %8 : vector<32x128xf32>
    %cst_5 = arith.constant dense<0.000000e+00> : vector<32xf32>
    %10 = vector.multi_reduction <add>, %9, %cst_5 [1] : vector<32x128xf32> to vector<32xf32>
    %11 = vector.shape_cast %10 : vector<32xf32> to vector<32x1xf32>
    %cst_6 = arith.constant 1.280000e+02 : f32
    %12 = vector.broadcast %cst_6 : f32 to vector<32x1xf32>
    %13 = arith.divf %11, %12 : vector<32x1xf32>
    %14 = vector.broadcast %6 : vector<32x1xf32> to vector<32x128xf32>
    %15 = arith.subf %2, %14 : vector<32x128xf32>
    %cst_7 = arith.constant 9.99999974E-6 : f32
    %16 = vector.broadcast %cst_7 : f32 to vector<32x1xf32>
    %17 = arith.addf %13, %16 : vector<32x1xf32>
    %18 = math.rsqrt %17 : vector<32x1xf32>
    %19 = vector.broadcast %18 : vector<32x1xf32> to vector<32x128xf32>
    %20 = arith.mulf %15, %19 : vector<32x128xf32>
    %c0_8 = arith.constant 0 : index
    %c0_9 = arith.constant 0 : index
    %21 = vector.load %arg3[%c0_8, %c0_9] : memref<32x1xf32, #tpu.memory_space<vmem>>, vector<32x1xf32>
    %22 = vector.broadcast %21 : vector<32x1xf32> to vector<32x128xf32>
    %23 = arith.mulf %20, %22 : vector<32x128xf32>
    %c0_10 = arith.constant 0 : index
    %c0_11 = arith.constant 0 : index
    %24 = vector.load %arg4[%c0_10, %c0_11] : memref<32x1xf32, #tpu.memory_space<vmem>>, vector<32x1xf32>
    %25 = vector.broadcast %24 : vector<32x1xf32> to vector<32x128xf32>
    %26 = arith.addf %23, %25 : vector<32x128xf32>
    %cst_12 = arith.constant 0.000000e+00 : f32
    %27 = vector.broadcast %cst_12 : f32 to vector<32x128xf32>
    %28 = arith.cmpf ogt, %26, %27 : vector<32x128xf32>
    %cst_13 = arith.constant 2.000000e-01 : f32
    %29 = vector.broadcast %cst_13 : f32 to vector<32x128xf32>
    %30 = arith.mulf %29, %26 : vector<32x128xf32>
    %31 = arith.select %28, %26, %30 : vector<32x128xi1>, vector<32x128xf32>
    %32 = arith.truncf %31 : vector<32x128xf32> to vector<32x128xbf16>
    %c0_14 = arith.constant 0 : index
    %c0_15 = arith.constant 0 : index
    %33 = vector.load %arg5[%c0_14, %c0_15] : memref<32x128xbf16, #tpu.memory_space<vmem>>, vector<32x128xbf16>
    tpu.vector_store %arg5[%c0_14, %c0_15], %32 {strides = array<i32>} : memref<32x128xbf16, #tpu.memory_space<vmem>>, vector<32x128xbf16>,
    return
  }
  func.func @transform_0(%arg0: i32) -> (i32, i32) {
    %c0_i32 = arith.constant 0 : i32
    %c0_i32_0 = arith.constant 0 : i32
    %c0_i32_1 = arith.constant 0 : i32
    return %c0_i32, %c0_i32_0 : i32, i32
  }
  func.func @transform_1(%arg0: i32) -> (i32, i32) {
    %c0_i32 = arith.constant 0 : i32
    %c0_i32_0 = arith.constant 0 : i32
    %c0_i32_1 = arith.constant 0 : i32
    return %c0_i32, %c0_i32_0 : i32, i32
  }
  func.func @transform_2(%arg0: i32) -> (i32, i32) {
    %c0_i32 = arith.constant 0 : i32
    %c0_i32_0 = arith.constant 0 : i32
    %c0_i32_1 = arith.constant 0 : i32
    return %c0_i32, %c0_i32_0 : i32, i32
  }
  func.func @transform_3(%arg0: i32) -> (i32, i32) {
    %c0_i32 = arith.constant 0 : i32
    %c0_i32_0 = arith.constant 0 : i32
    %c0_i32_1 = arith.constant 0 : i32
    return %c0_i32, %c0_i32_0 : i32, i32
  }
  func.func @transform_4(%arg0: i32) -> (i32, i32) {
    %c0_i32 = arith.constant 0 : i32
    %c0_i32_0 = arith.constant 0 : i32
    %c0_i32_1 = arith.constant 0 : i32
    return %c0_i32, %c0_i32_0 : i32, i32
  }
}

module attributes {stable_mosaic.version = 11 : i64} {
  func.func @_conv_bn_leaky_head_kernel(%arg0: i32, %arg1: memref<64x512xbf16, #tpu.memory_space<vmem>>, %arg2: memref<512x32xbf16, #tpu.memory_space<vmem>>, %arg3: memref<64x1xf32, #tpu.memory_space<vmem>>, %arg4: memref<64x1xf32, #tpu.memory_space<vmem>>, %arg5: memref<64x32xf32, #tpu.memory_space<vmem>>, %arg6: memref<2x32xf32, #tpu.memory_space<vmem>>, %arg7: memref<2x1xf32, #tpu.memory_space<vmem>>) attributes {dimension_semantics = [#tpu.dimension_semantics<arbitrary>], iteration_bounds = array<i64: 1>, scalar_prefetch = 0 : i64, scratch_operands = 0 : i64, tpu.core_type = #tpu.core_type<tc>, window_params = [{pipeline_mode = #tpu.pipeline_mode<synchronous>, transform_indices = @transform_0, window_bounds = array<i64: 64, 512>}, {pipeline_mode = #tpu.pipeline_mode<synchronous>, transform_indices = @transform_1, window_bounds = array<i64: 512, 32>}, {pipeline_mode = #tpu.pipeline_mode<synchronous>, transform_indices = @transform_2, window_bounds = array<i64: 64, 1>}, {pipeline_mode = #tpu.pipeline_mode<synchronous>, transform_indices = @transform_3, window_bounds = array<i64: 64, 1>}, {pipeline_mode = #tpu.pipeline_mode<synchronous>, transform_indices = @transform_4, window_bounds = array<i64: 64, 32>}, {pipeline_mode = #tpu.pipeline_mode<synchronous>, transform_indices = @transform_5, window_bounds = array<i64: 2, 32>}, {pipeline_mode = #tpu.pipeline_mode<synchronous>, transform_indices = @transform_6, window_bounds = array<i64: 2, 1>}]} {
    %c0 = arith.constant 0 : index
    %c0_0 = arith.constant 0 : index
    %0 = vector.load %arg1[%c0, %c0_0] : memref<64x512xbf16, #tpu.memory_space<vmem>>, vector<64x512xbf16>
    %c0_1 = arith.constant 0 : index
    %c0_2 = arith.constant 0 : index
    %1 = vector.load %arg2[%c0_1, %c0_2] : memref<512x32xbf16, #tpu.memory_space<vmem>>, vector<512x32xbf16>
    %cst = arith.constant dense<0.000000e+00> : vector<64x32xf32>
    %2 = tpu.matmul %0, %1, %cst {dimension_numbers = #tpu.dot_dimension_numbers<[1], [0], [0], [1], [0, 0, 1, 1], [], []>} : vector<64x512xbf16>, vector<512x32xbf16>, vector<64x32xf32> -> vector<64x32xf32>
    %cst_3 = arith.constant dense<0.000000e+00> : vector<64xf32>
    %3 = vector.multi_reduction <add>, %2, %cst_3 [1] : vector<64x32xf32> to vector<64xf32>
    %4 = vector.shape_cast %3 : vector<64xf32> to vector<64x1xf32>
    %cst_4 = arith.constant 3.200000e+01 : f32
    %5 = vector.broadcast %cst_4 : f32 to vector<64x1xf32>
    %6 = arith.divf %4, %5 : vector<64x1xf32>
    %7 = vector.broadcast %6 : vector<64x1xf32> to vector<64x32xf32>
    %8 = arith.subf %2, %7 : vector<64x32xf32>
    %9 = arith.mulf %8, %8 : vector<64x32xf32>
    %cst_5 = arith.constant dense<0.000000e+00> : vector<64xf32>
    %10 = vector.multi_reduction <add>, %9, %cst_5 [1] : vector<64x32xf32> to vector<64xf32>
    %11 = vector.shape_cast %10 : vector<64xf32> to vector<64x1xf32>
    %cst_6 = arith.constant 3.200000e+01 : f32
    %12 = vector.broadcast %cst_6 : f32 to vector<64x1xf32>
    %13 = arith.divf %11, %12 : vector<64x1xf32>
    %14 = vector.broadcast %6 : vector<64x1xf32> to vector<64x32xf32>
    %15 = arith.subf %2, %14 : vector<64x32xf32>
    %cst_7 = arith.constant 9.99999974E-6 : f32
    %16 = vector.broadcast %cst_7 : f32 to vector<64x1xf32>
    %17 = arith.addf %13, %16 : vector<64x1xf32>
    %18 = math.rsqrt %17 : vector<64x1xf32>
    %19 = vector.broadcast %18 : vector<64x1xf32> to vector<64x32xf32>
    %20 = arith.mulf %15, %19 : vector<64x32xf32>
    %c0_8 = arith.constant 0 : index
    %c0_9 = arith.constant 0 : index
    %21 = vector.load %arg3[%c0_8, %c0_9] : memref<64x1xf32, #tpu.memory_space<vmem>>, vector<64x1xf32>
    %22 = vector.broadcast %21 : vector<64x1xf32> to vector<64x32xf32>
    %23 = arith.mulf %20, %22 : vector<64x32xf32>
    %c0_10 = arith.constant 0 : index
    %c0_11 = arith.constant 0 : index
    %24 = vector.load %arg4[%c0_10, %c0_11] : memref<64x1xf32, #tpu.memory_space<vmem>>, vector<64x1xf32>
    %25 = vector.broadcast %24 : vector<64x1xf32> to vector<64x32xf32>
    %26 = arith.addf %23, %25 : vector<64x32xf32>
    %cst_12 = arith.constant 0.000000e+00 : f32
    %27 = vector.broadcast %cst_12 : f32 to vector<64x32xf32>
    %28 = arith.cmpf ogt, %26, %27 : vector<64x32xf32>
    %cst_13 = arith.constant 2.000000e-01 : f32
    %29 = vector.broadcast %cst_13 : f32 to vector<64x32xf32>
    %30 = arith.mulf %29, %26 : vector<64x32xf32>
    %31 = arith.select %28, %26, %30 : vector<64x32xi1>, vector<64x32xf32>
    %c0_14 = arith.constant 0 : index
    %c0_15 = arith.constant 0 : index
    %32 = vector.load %arg5[%c0_14, %c0_15] : memref<64x32xf32, #tpu.memory_space<vmem>>, vector<64x32xf32>
    %33 = arith.mulf %31, %32 : vector<64x32xf32>
    %cst_16 = arith.constant dense<0.000000e+00> : vector<32xf32>
    %34 = vector.multi_reduction <add>, %33, %cst_16 [0] : vector<64x32xf32> to vector<32xf32>
    %35 = vector.shape_cast %34 : vector<32xf32> to vector<1x32xf32>
    %c0_17 = arith.constant 0 : index
    %c0_18 = arith.constant 0 : index
    %36 = vector.load %arg6[%c0_17, %c0_18] : memref<2x32xf32, #tpu.memory_space<vmem>>, vector<2x32xf32>
    %37 = vector.broadcast %35 : vector<1x32xf32> to vector<2x32xf32>
    %38 = arith.mulf %36, %37 : vector<2x32xf32>
    %cst_19 = arith.constant dense<0.000000e+00> : vector<2xf32>
    %39 = vector.multi_reduction <add>, %38, %cst_19 [1] : vector<2x32xf32> to vector<2xf32>
    %40 = vector.shape_cast %39 : vector<2xf32> to vector<2x1xf32>
    %41 = arith.negf %40 : vector<2x1xf32>
    %42 = math.exp %41 : vector<2x1xf32>
    %cst_20 = arith.constant 1.000000e+00 : f32
    %43 = vector.broadcast %cst_20 : f32 to vector<2x1xf32>
    %44 = arith.addf %43, %42 : vector<2x1xf32>
    %45 = arith.divf %43, %44 : vector<2x1xf32>
    %c0_21 = arith.constant 0 : index
    %c0_22 = arith.constant 0 : index
    %46 = vector.load %arg7[%c0_21, %c0_22] : memref<2x1xf32, #tpu.memory_space<vmem>>, vector<2x1xf32>
    tpu.vector_store %arg7[%c0_21, %c0_22], %45 {strides = array<i32>} : memref<2x1xf32, #tpu.memory_space<vmem>>, vector<2x1xf32>,
    return
  }
  func.func @transform_0(%arg0: i32) -> (i32, i32) {
    %c0_i32 = arith.constant 0 : i32
    %c0_i32_0 = arith.constant 0 : i32
    %c0_i32_1 = arith.constant 0 : i32
    return %c0_i32, %c0_i32_0 : i32, i32
  }
  func.func @transform_1(%arg0: i32) -> (i32, i32) {
    %c0_i32 = arith.constant 0 : i32
    %c0_i32_0 = arith.constant 0 : i32
    %c0_i32_1 = arith.constant 0 : i32
    return %c0_i32, %c0_i32_0 : i32, i32
  }
  func.func @transform_2(%arg0: i32) -> (i32, i32) {
    %c0_i32 = arith.constant 0 : i32
    %c0_i32_0 = arith.constant 0 : i32
    %c0_i32_1 = arith.constant 0 : i32
    return %c0_i32, %c0_i32_0 : i32, i32
  }
  func.func @transform_3(%arg0: i32) -> (i32, i32) {
    %c0_i32 = arith.constant 0 : i32
    %c0_i32_0 = arith.constant 0 : i32
    %c0_i32_1 = arith.constant 0 : i32
    return %c0_i32, %c0_i32_0 : i32, i32
  }
  func.func @transform_4(%arg0: i32) -> (i32, i32) {
    %c0_i32 = arith.constant 0 : i32
    %c0_i32_0 = arith.constant 0 : i32
    %c0_i32_1 = arith.constant 0 : i32
    return %c0_i32, %c0_i32_0 : i32, i32
  }
  func.func @transform_5(%arg0: i32) -> (i32, i32) {
    %c0_i32 = arith.constant 0 : i32
    %c0_i32_0 = arith.constant 0 : i32
    %c0_i32_1 = arith.constant 0 : i32
    return %c0_i32, %c0_i32_0 : i32, i32
  }
  func.func @transform_6(%arg0: i32) -> (i32, i32) {
    %c0_i32 = arith.constant 0 : i32
    %c0_i32_0 = arith.constant 0 : i32
    %c0_i32_1 = arith.constant 0 : i32
    return %c0_i32, %c0_i32_0 : i32, i32
  }
}

</mosaic_0001>

<llo_original>
// kernel: discriminator_forward.4
$region0: #{discriminator_forward.4}
  #allocation0 [shape = 'u32[]', space=smem, size = 0x4, offset = 0x4, fixed_abs, tag = 'smem constant byte address 0x4 - core index']
  #allocation1 [shape = 'u32[144,128]{1,0:T(1,128)}', space=vmem, size = 0x12000, scoped, tag = 'internal scratch']
  %s0 = inlined_call_operand.vmem [shape: bf16[8,48], index: 0, kind: input, shape index: {}]
  %s1 = inlined_call_operand.vmem [shape: bf16[48,2048], index: 1, kind: input, shape index: {}]
  %s2 = inlined_call_operand.vmem [shape: bf16[8,2048], index: 2, kind: output, shape index: {}]
  %s3 = sld [smem:[#allocation0]]
  $region64: #{discriminator_forward.4} parent=0
    _
  %s5 = ssub.s32 1, %s3
  %s6 = scalar_select 0, %s5, %s3
  $region1: #{discriminator_forward.4} parent=0
    #allocation2 [shape = 'u8[98304]{0}', space=vmem, size = 0x18000, scoped, tag = 'input window, operand 1']
    loop: start=0, step=1, limit=6
    $region2: #{discriminator_forward.4} parent=1 // loop_pre_header
      _
    $region3: #{discriminator_forward.4} parent=1 // loop_header
      %s8 = sphi 0, %s12
      %p9 = scmp.ge.s32.totalorder %s8, 6
      %s16 = sphi 0, %s16
      %s18 = sphi 0, %s16
      %s19 = sphi 0, %s18
      %s33 = sphi 0, %s19
      %s39 = sphi 0, %s41
      %s42 = sphi 0, %s39
      %s43 = sphi 0, %s42
      %s59 = sphi 0, %s43
      %s65 = sphi 0, %s67
      %s68 = sphi 0, %s65
      %s69 = sphi 0, %s68
      %s85 = sphi 0, %s69
    $region4: #{discriminator_forward.4} parent=1 // loop_header_branch
      %11 = sbr.rel (%p9) target = $region8
    $region5: #{discriminator_forward.4} parent=1 // loop_body
      %s13 = ssub.s32 %s8, 1
      %s14 = ssub.s32 %s8, 2
      %s15 = sadd.s32 %s8, 1
      %s17 = sadd.s32 %s16, 1
      %p20 = scmp.eq.s32.totalorder %s8, 3
      %p21 = scmp.ne.s32.totalorder %s16, %s18
      %p22 = scmp.eq.s32.totalorder %s8, 0
      %p23 = por %p21, %p22
      %p24 = scmp.ne.s32.totalorder %s16, %s18
      %p25 = scmp.eq.s32.totalorder %s13, 3
      %p26 = por %p24, %p25
      %p27 = scmp.ne.s32.totalorder %s18, %s19
      %p28 = scmp.eq.s32.totalorder %s13, 0
      %p29 = por %p27, %p28
      %p30 = scmp.ne.s32.totalorder %s18, %s19
      %p31 = scmp.eq.s32.totalorder %s14, 3
      %p32 = por %p30, %p31
      %p34 = scmp.ne.s32.totalorder %s19, %s33
      %p35 = scmp.eq.s32.totalorder %s14, 0
      %p36 = por %p34, %p35
      %s37 = ssub.s32 %s8, %s15
      %p38 = scmp.eq.s32.totalorder %s37, 0
      %s40 = sadd.s32 %s39, 1
      %s41 = scalar_select %p38, %s39, %s40
      %p44 = pneg %p38
      %p45 = scmp.eq.s32.totalorder %s8, 3
      %p46 = por %p44, %p45
      %p47 = scmp.ne.s32.totalorder %s39, %s42
      %p48 = scmp.eq.s32.totalorder %s8, 0
      %p49 = por %p47, %p48
      %p50 = scmp.ne.s32.totalorder %s39, %s42
      %p51 = scmp.eq.s32.totalorder %s13, 3
      %p52 = por %p50, %p51
      %p53 = scmp.ne.s32.totalorder %s42, %s43
      %p54 = scmp.eq.s32.totalorder %s13, 0
      %p55 = por %p53, %p54
      %p56 = scmp.ne.s32.totalorder %s42, %s43
      %p57 = scmp.eq.s32.totalorder %s14, 3
      %p58 = por %p56, %p57
      %p60 = scmp.ne.s32.totalorder %s43, %s59
      %p61 = scmp.eq.s32.totalorder %s14, 0
      %p62 = por %p60, %p61
      %s63 = ssub.s32 %s8, %s15
      %p64 = scmp.eq.s32.totalorder %s63, 0
      %s66 = sadd.s32 %s65, 1
      %s67 = scalar_select %p64, %s65, %s66
      %p70 = pneg %p64
      %p71 = scmp.eq.s32.totalorder %s8, 3
      %p72 = por %p70, %p71
      %p73 = scmp.ne.s32.totalorder %s65, %s68
      %p74 = scmp.eq.s32.totalorder %s8, 0
      %p75 = por %p73, %p74
      %p76 = scmp.ne.s32.totalorder %s65, %s68
      %p77 = scmp.eq.s32.totalorder %s13, 3
      %p78 = por %p76, %p77
      %p79 = scmp.ne.s32.totalorder %s68, %s69
      %p80 = scmp.eq.s32.totalorder %s13, 0
      %p81 = por %p79, %p80
      %p82 = scmp.ne.s32.totalorder %s68, %s69
      %p83 = scmp.eq.s32.totalorder %s14, 3
      %p84 = por %p82, %p83
      %p86 = scmp.ne.s32.totalorder %s69, %s85
      %p87 = scmp.eq.s32.totalorder %s14, 0
      %p88 = por %p86, %p87
      %p89 = scmp.le.s32.totalorder 1, %s8
      %p90 = scmp.lt.s32.totalorder %s8, 5
      %p91 = pnand %p89, %p90
      %p92 = pneg %p91
      // Predicated region
      $region9: #{discriminator_forward.4} parent=5 // pred_check
        _
      $region10: #{discriminator_forward.4} parent=5 // pred_check_branch
        %94 = sbr.rel (%p91) target = $region12
      $region11: #{discriminator_forward.4} parent=5 // pred_region
        %s95 = ssub.s32 %s8, 1
        // Predicated region
        $region13: #{discriminator_forward.4} parent=11 // pred_check
          %p96 = pneg %p29
        $region14: #{discriminator_forward.4} parent=11 // pred_check_branch
          %98 = sbr.rel (%p96) target = $region16
        $region15: #{discriminator_forward.4} parent=11 // pred_region
          _
        $region16: #{discriminator_forward.4} parent=11 // pred_fallthru
          _
      $region12: #{discriminator_forward.4} parent=5 // pred_fallthru
        _
      %p99 = scmp.lt.s32.totalorder %s8, 4
      // Predicated region
      $region17: #{discriminator_forward.4} parent=5 // pred_check
        %p100 = pneg %p99
      $region18: #{discriminator_forward.4} parent=5 // pred_check_branch
        %102 = sbr.rel (%p100) target = $region20
      $region19: #{discriminator_forward.4} parent=5 // pred_region
        // Predicated region
        $region21: #{discriminator_forward.4} parent=19 // pred_check
          %p103 = pneg %p49
        $region22: #{discriminator_forward.4} parent=19 // pred_check_branch
          %105 = sbr.rel (%p103) target = $region24
        $region23: #{discriminator_forward.4} parent=19 // pred_region
          %s106 = sand.u32 %s39, 1
          %s107 = sand.u32 %s39, 1
          %s108 = smul.addr %s107, 96
          %s109 = scalar_lea.vmem [#allocation2], %s108
          %s110 = smul.u32 4, %s8
          %s111 = smul.addr %s110, 4
          %s112 = scalar_lea.vmem %s1, %s111
          // Predicated region
          $region25: #{discriminator_forward.4} parent=23 // pred_check
            _
          $region26: #{discriminator_forward.4} parent=23 // pred_check_branch
            %114 = sbr.rel (0) target = $region28
          $region27: #{discriminator_forward.4} parent=23 // pred_region
            // Predicated region
            $region29: #{discriminator_forward.4} parent=27 // pred_check
              _
            $region30: #{discriminator_forward.4} parent=27 // pred_check_branch
              %116 = sbr.rel (0) target = $region32
            $region31: #{discriminator_forward.4} parent=27 // pred_region
              loop: start=0, step=1, limit=1
              $region33: #{discriminator_forward.4} parent=31 // loop_pre_header
                _
              $region34: #{discriminator_forward.4} parent=31 // loop_header
                %s118 = sphi 0, %s122
                %p119 = scmp.ge.s32.totalorder %s118, 1
                %s123 = sphi %s112, %s112
                %s124 = sphi %s109, %s109
              $region35: #{discriminator_forward.4} parent=31 // loop_header_branch
                %121 = sbr.rel (%p119) target = $region39
              $region36: #{discriminator_forward.4} parent=31 // loop_body
                %v125 = vld [vmem:[%s123] sm:$0xff]
                %126 = vst [vmem:[%s124] sm:$0xff] %v125
                %v127 = vld [vmem:[%s123 + $0x8] sm:$0xff]
                %128 = vst [vmem:[%s124 + $0x8] sm:$0xff] %v127
                %v129 = vld [vmem:[%s123 + $0x40] sm:$0xff]
                %130 = vst [vmem:[%s124 + $0x10] sm:$0xff] %v129
                %v131 = vld [vmem:[%s123 + $0x48] sm:$0xff]
                %132 = vst [vmem:[%s124 + $0x18] sm:$0xff] %v131
                %v133 = vld [vmem:[%s123 + $0x80] sm:$0xff]
                %134 = vst [vmem:[%s124 + $0x20] sm:$0xff] %v133
                %v135 = vld [vmem:[%s123 + $0x88] sm:$0xff]
                %136 = vst [vmem:[%s124 + $0x28] sm:$0xff] %v135
                %v137 = vld [vmem:[%s123 + $0xc0] sm:$0xff]
                %138 = vst [vmem:[%s124 + $0x30] sm:$0xff] %v137
                %v139 = vld [vmem:[%s123 + $0xc8] sm:$0xff]
                %140 = vst [vmem:[%s124 + $0x38] sm:$0xff] %v139
                %v141 = vld [vmem:[%s123 + $0x100] sm:$0xff]
                %142 = vst [vmem:[%s124 + $0x40] sm:$0xff] %v141
                %v143 = vld [vmem:[%s123 + $0x108] sm:$0xff]
                %144 = vst [vmem:[%s124 + $0x48] sm:$0xff] %v143
                %v145 = vld [vmem:[%s123 + $0x140] sm:$0xff]
                %146 = vst [vmem:[%s124 + $0x50] sm:$0xff] %v145
                %v147 = vld [vmem:[%s123 + $0x148] sm:$0xff]
                %148 = vst [vmem:[%s124 + $0x58] sm:$0xff] %v147
              $region37: #{discriminator_forward.4} parent=31 // loop_footer
                %s122 = sadd.s32 1, %s118
              $region38: #{discriminator_forward.4} parent=31 // loop_footer_branch
                %117 = sbr.rel target = $region34
              $region39: #{discriminator_forward.4} parent=31 // loop_exit
                _
            $region32: #{discriminator_forward.4} parent=27 // pred_fallthru
              _
            // Predicated region
            $region40: #{discriminator_forward.4} parent=27 // pred_check
              _
            $region41: #{discriminator_forward.4} parent=27 // pred_check_branch
              %150 = sbr.rel target = $region43
            $region42: #{discriminator_forward.4} parent=27 // pred_region
              _
            $region43: #{discriminator_forward.4} parent=27 // pred_fallthru
              _
          $region28: #{discriminator_forward.4} parent=23 // pred_fallthru
            _
          %151 = vnop
        $region24: #{discriminator_forward.4} parent=19 // pred_fallthru
          _
      $region20: #{discriminator_forward.4} parent=5 // pred_fallthru
        _
      %p152 = scmp.le.s32.totalorder 1, %s8
      %p153 = scmp.lt.s32.totalorder %s8, 5
      %p154 = pnand %p152, %p153
      %p155 = pneg %p154
      // Predicated region
      $region44: #{discriminator_forward.4} parent=5 // pred_check
        _
      $region45: #{discriminator_forward.4} parent=5 // pred_check_branch
        %157 = sbr.rel (%p154) target = $region47
      $region46: #{discriminator_forward.4} parent=5 // pred_region
        %s158 = ssub.s32 %s8, 1
        %s159 = sand.u32 %s42, 1
        %s160 = sand.u32 %s42, 1
        %s161 = smul.addr %s160, 96
        %s162 = scalar_lea.vmem [#allocation2], %s161
        // Predicated region
        $region48: #{discriminator_forward.4} parent=46 // pred_check
          %p163 = pneg %p55
        $region49: #{discriminator_forward.4} parent=46 // pred_check_branch
          %165 = sbr.rel (%p163) target = $region51
        $region50: #{discriminator_forward.4} parent=46 // pred_region
          _
        $region51: #{discriminator_forward.4} parent=46 // pred_fallthru
          _
        %p166 = pneg %p29
        %p167 = pneg %p26
        %s168 = sand.u32 %s42, 1
        %s169 = sand.u32 %s42, 1
        %s170 = smul.addr %s169, 96
        %s171 = scalar_lea.vmem [#allocation2], %s170
        %p172 = pneg %p55
        %p173 = pneg %p52
        %p174 = pneg %p81
        %p175 = pneg %p78
        %s176 = smul.u32 4, %s13
        %p177 = scmp.lt.s32.totalorder %s176, 15
        %s178 = scalar_select %p177, %s176, 15
        %s179 = smul.addr %s178, 4
        %s180 = scalar_lea.vmem %s2, %s179
        %s181 = smul.u32 4, %s13
        %s182 = smul.u32 4, %s13
        %p183 = scmp.lt.s32.totalorder %s182, 15
        %s184 = scalar_select %p183, %s182, 15
        %s185 = smul.addr %s184, 4
        %s186 = scalar_lea.vmem %s2, %s185
        %s187 = smul.u32 4, %s13
        %v189 = vld [vmem:[%s0] sm:$0xf]
        %v190 = vld [vmem:[%s162] sm:$0xff]
        %v191 = vld [vmem:[%s162 + $0x8] sm:$0xff]
        %v192 = vld [vmem:[%s162 + $0x10] sm:$0xff]
        %v193 = vld [vmem:[%s162 + $0x18] sm:$0xff]
        %v194 = vld [vmem:[%s162 + $0x20] sm:$0xff]
        %v195 = vld [vmem:[%s162 + $0x28] sm:$0xff]
        %v196 = vld [vmem:[%s162 + $0x30] sm:$0xff]
        %v197 = vld [vmem:[%s162 + $0x38] sm:$0xff]
        %v198 = vld [vmem:[%s162 + $0x40] sm:$0xff]
        %v199 = vld [vmem:[%s162 + $0x48] sm:$0xff]
        %v200 = vld [vmem:[%s162 + $0x50] sm:$0xff]
        %v201 = vld [vmem:[%s162 + $0x58] sm:$0xff]
        %v214 = vunpack.c.l.b16 %v190
        %v215 = vunpack.c.h.b16 %v190
        %v216 = vunpack.c.l.b16 %v191
        %v217 = vunpack.c.h.b16 %v191
        %v218 = vunpack.c.l.b16 %v192
        %v219 = vunpack.c.h.b16 %v192
        %v220 = vunpack.c.l.b16 %v193
        %v221 = vunpack.c.h.b16 %v193
        %v222 = vunpack.c.l.b16 %v194
        %v223 = vunpack.c.h.b16 %v194
        %v224 = vunpack.c.l.b16 %v195
        %v225 = vunpack.c.h.b16 %v195
        %v226 = vunpack.c.l.b16 %v196
        %v227 = vunpack.c.h.b16 %v196
        %v228 = vunpack.c.l.b16 %v197
        %v229 = vunpack.c.h.b16 %v197
        %v230 = vunpack.c.l.b16 %v198
        %v231 = vunpack.c.h.b16 %v198
        %v232 = vunpack.c.l.b16 %v199
        %v233 = vunpack.c.h.b16 %v199
        %v234 = vunpack.c.l.b16 %v200
        %v235 = vunpack.c.h.b16 %v200
        %v236 = vunpack.c.l.b16 %v201
        %v237 = vunpack.c.h.b16 %v201
        %v238 = vpack.c.b16 %v218, %v214
        %v239 = vpack.c.b16 %v219, %v215
        %v240 = vpack.c.b16 %v220, %v216
        %v241 = vpack.c.b16 %v221, %v217
        %v242 = vpack.c.b16 %v226, %v222
        %v243 = vpack.c.b16 %v227, %v223
        %v244 = vpack.c.b16 %v228, %v224
        %v245 = vpack.c.b16 %v229, %v225
        %v246 = vpack.c.b16 %v234, %v230
        %v247 = vpack.c.b16 %v235, %v231
        %v248 = vpack.c.b16 %v236, %v232
        %v249 = vpack.c.b16 %v237, %v233
        %vm262 = vcmask 392192
        %v264 = vsel %vm262, %v189, 0
        %266 = vmatprep.subr.bf16.mxu0 %v239
        %267 = vmatpush1.bf16.msra.mxu0 %v238
        %268 = vmatprep.subr.bf16.mxu0 %v243
        %269 = vmatpush1.bf16.msra.mxu0 %v242
        %270 = vmatprep.subr.bf16.mxu0 %v247
        %271 = vmatpush1.bf16.msra.mxu0 %v246
        %272 = vmatprep.subr.bf16.mxu0 0
        %273 = vmatpush1.bf16.msra.mxu0 0
        %274 = vmatprep.subr.bf16.mxu0 0
        %275 = vmatpush1.bf16.msra.mxu0 0
        %276 = vmatprep.subr.bf16.mxu0 0
        %277 = vmatpush1.bf16.msra.mxu0 0
        %278 = vmatprep.subr.bf16.mxu0 0
        %279 = vmatpush1.bf16.msra.mxu0 0
        %280 = vmatprep.subr.bf16.mxu0 0
        %281 = vmatpush1.bf16.msra.mxu0 0
        %282 = vmatprep.subr.bf16.mxu0 0
        %283 = vmatpush1.bf16.msra.mxu0 0
        %284 = vmatprep.subr.bf16.mxu0 0
        %285 = vmatpush1.bf16.msra.mxu0 0
        %286 = vmatprep.subr.bf16.mxu0 0
        %287 = vmatpush1.bf16.msra.mxu0 0
        %288 = vmatprep.subr.bf16.mxu0 0
        %289 = vmatpush1.bf16.msra.mxu0 0
        %290 = vmatprep.subr.bf16.mxu0 0
        %291 = vmatpush1.bf16.msra.mxu0 0
        %292 = vmatprep.subr.bf16.mxu0 0
        %293 = vmatpush1.bf16.msra.mxu0 0
        %294 = vmatprep.subr.bf16.mxu0 0
        %295 = vmatpush1.bf16.msra.mxu0 0
        %296 = vmatprep.subr.bf16.mxu0 0
        %297 = vmatpush1.bf16.msra.mxu0 0
        %298 = vmatprep.mubr.bf16.mxu0 0
        %299 = vmatmul.mubr.bf16.gmra.mrb[0].mxu0 %v264
        %v300 = vpop.f32.mrb[0].mxu0
        %v301 = vadd.f32 0.0, %v300
        %v302 = vpop.f32.mrb[0].mxu0
        %v303 = vadd.f32 0.0, %v302
        %v304 = vpop.f32.mrb[0].mxu0
        %v305 = vpop.f32.mrb[0].mxu0
        %306 = vdwg.mxu0
        %307 = vmatprep.subr.bf16.mxu0 %v241
        %308 = vmatpush1.bf16.msra.mxu0 %v240
        %309 = vmatprep.subr.bf16.mxu0 %v245
        %310 = vmatpush1.bf16.msra.mxu0 %v244
        %311 = vmatprep.subr.bf16.mxu0 %v249
        %312 = vmatpush1.bf16.msra.mxu0 %v248
        %313 = vmatprep.subr.bf16.mxu0 0
        %314 = vmatpush1.bf16.msra.mxu0 0
        %315 = vmatprep.subr.bf16.mxu0 0
        %316 = vmatpush1.bf16.msra.mxu0 0
        %317 = vmatprep.subr.bf16.mxu0 0
        %318 = vmatpush1.bf16.msra.mxu0 0
        %319 = vmatprep.subr.bf16.mxu0 0
        %320 = vmatpush1.bf16.msra.mxu0 0
        %321 = vmatprep.subr.bf16.mxu0 0
        %322 = vmatpush1.bf16.msra.mxu0 0
        %323 = vmatprep.subr.bf16.mxu0 0
        %324 = vmatpush1.bf16.msra.mxu0 0
        %325 = vmatprep.subr.bf16.mxu0 0
        %326 = vmatpush1.bf16.msra.mxu0 0
        %327 = vmatprep.subr.bf16.mxu0 0
        %328 = vmatpush1.bf16.msra.mxu0 0
        %329 = vmatprep.subr.bf16.mxu0 0
        %330 = vmatpush1.bf16.msra.mxu0 0
        %331 = vmatprep.subr.bf16.mxu0 0
        %332 = vmatpush1.bf16.msra.mxu0 0
        %333 = vmatprep.subr.bf16.mxu0 0
        %334 = vmatpush1.bf16.msra.mxu0 0
        %335 = vmatprep.subr.bf16.mxu0 0
        %336 = vmatpush1.bf16.msra.mxu0 0
        %337 = vmatprep.subr.bf16.mxu0 0
        %338 = vmatpush1.bf16.msra.mxu0 0
        %339 = vmatprep.mubr.bf16.mxu0 0
        %340 = vmatmul.mubr.bf16.gmra.mrb[0].mxu0 %v264
        %v341 = vpop.f32.mrb[0].mxu0
        %v342 = vadd.f32 0.0, %v341
        %v343 = vpop.f32.mrb[0].mxu0
        %v344 = vadd.f32 0.0, %v343
        %v345 = vpop.f32.mrb[0].mxu0
        %v346 = vpop.f32.mrb[0].mxu0
        %347 = vdwg.mxu0
        %vm348 = vcmp.gt.f32.partialorder %v301, 0.0
        %vm349 = vcmp.gt.f32.partialorder %v303, 0.0
        %vm350 = vcmp.gt.f32.partialorder %v342, 0.0
        %vm351 = vcmp.gt.f32.partialorder %v344, 0.0
        %v352 = vmul.f32 %v301, 0.2
        %v353 = vmul.f32 %v303, 0.2
        %v354 = vmul.f32 %v342, 0.2
        %v355 = vmul.f32 %v344, 0.2
        %v356 = vsel %vm348, %v301, %v352
        %v357 = vsel %vm349, %v303, %v353
        %v358 = vsel %vm350, %v342, %v354
        %v359 = vsel %vm351, %v344, %v355
        %v360 = vpack.c.bf16 %v356, %v356
        %v361 = vpack.c.bf16 %v357, %v357
        %v362 = vpack.c.bf16 %v358, %v358
        %v363 = vpack.c.bf16 %v359, %v359
        %v368 = vunpack.c.l.b16 %v360
        %v369 = vunpack.c.l.b16 %v361
        %v370 = vunpack.c.l.b16 %v362
        %v371 = vunpack.c.l.b16 %v363
        %v372 = vpack.c.b16 %v369, %v368
        %v373 = vpack.c.b16 %v371, %v370
        %376 = vst [vmem:[%s186] sm:$0xff] %v372
        %377 = vst [vmem:[%s186 + $0x8] sm:$0xff] %v373
        %s378 = smul.u32 4, %s13
        %p379 = scmp.lt.s32.totalorder %s378, 15
        %s380 = scalar_select %p379, %s378, 15
        %s381 = smul.addr %s380, 4
        %s382 = scalar_lea.vmem %s2, %s381
        // Predicated region
        $region52: #{discriminator_forward.4} parent=46 // pred_check
          %p383 = pneg %p78
        $region53: #{discriminator_forward.4} parent=46 // pred_check_branch
          %385 = sbr.rel (%p383) target = $region55
        $region54: #{discriminator_forward.4} parent=46 // pred_region
          %s386 = smul.u32 4, %s13
        $region55: #{discriminator_forward.4} parent=46 // pred_fallthru
          _
      $region47: #{discriminator_forward.4} parent=5 // pred_fallthru
        _
      %p387 = scmp.le.s32.totalorder 2, %s8
      // Predicated region
      $region56: #{discriminator_forward.4} parent=5 // pred_check
        %p388 = pneg %p387
      $region57: #{discriminator_forward.4} parent=5 // pred_check_branch
        %390 = sbr.rel (%p388) target = $region59
      $region58: #{discriminator_forward.4} parent=5 // pred_region
        %s391 = ssub.s32 %s8, 2
        // Predicated region
        $region60: #{discriminator_forward.4} parent=58 // pred_check
          %p392 = pneg %p84
        $region61: #{discriminator_forward.4} parent=58 // pred_check_branch
          %394 = sbr.rel (%p392) target = $region63
        $region62: #{discriminator_forward.4} parent=58 // pred_region
          %s395 = smul.u32 4, %s14
          %p396 = scmp.lt.s32.totalorder %s395, 15
          %s397 = scalar_select %p396, %s395, 15
          %s398 = smul.addr %s397, 4
          %s399 = scalar_lea.vmem %s2, %s398
        $region63: #{discriminator_forward.4} parent=58 // pred_fallthru
          _
      $region59: #{discriminator_forward.4} parent=5 // pred_fallthru
        _
    $region6: #{discriminator_forward.4} parent=1 // loop_footer
      %s12 = sadd.s32 1, %s8
    $region7: #{discriminator_forward.4} parent=1 // loop_footer_branch
      %7 = sbr.rel target = $region3
    $region8: #{discriminator_forward.4} parent=1 // loop_exit
      _

// kernel: discriminator_forward.5
$region0: #{discriminator_forward.5}
  #allocation0 [shape = 'u32[]', space=smem, size = 0x4, offset = 0x4, fixed_abs, tag = 'smem constant byte address 0x4 - core index']
  #allocation1 [shape = 'u32[144,128]{1,0:T(1,128)}', space=vmem, size = 0x12000, scoped, tag = 'internal scratch']
  %s0 = inlined_call_operand.vmem [shape: bf16[16,128], index: 0, kind: input, shape index: {}]
  %s1 = inlined_call_operand.vmem [shape: bf16[128,512], index: 1, kind: input, shape index: {}]
  %s2 = inlined_call_operand.vmem [shape: f32[16,1], index: 2, kind: input, shape index: {}]
  %s3 = inlined_call_operand.vmem [shape: f32[16,1], index: 3, kind: input, shape index: {}]
  %s4 = inlined_call_operand.vmem [shape: bf16[16,512], index: 4, kind: output, shape index: {}]
  %s5 = sld [smem:[#allocation0]]
  $region26: #{discriminator_forward.5} parent=0
    _
  %s7 = ssub.s32 1, %s5
  %s8 = scalar_select 0, %s7, %s5
  // Predicated region
  $region2: #{discriminator_forward.5} parent=0 // pred_check
    _
  $region3: #{discriminator_forward.5} parent=0 // pred_check_branch
    %10 = sbr.rel (0) target = $region5
  $region4: #{discriminator_forward.5} parent=0 // pred_region
    _
  $region5: #{discriminator_forward.5} parent=0 // pred_fallthru
    _
  // Predicated region
  $region6: #{discriminator_forward.5} parent=0 // pred_check
    _
  $region7: #{discriminator_forward.5} parent=0 // pred_check_branch
    %12 = sbr.rel (0) target = $region9
  $region8: #{discriminator_forward.5} parent=0 // pred_region
    _
  $region9: #{discriminator_forward.5} parent=0 // pred_fallthru
    _
  // Predicated region
  $region10: #{discriminator_forward.5} parent=0 // pred_check
    _
  $region11: #{discriminator_forward.5} parent=0 // pred_check_branch
    %14 = sbr.rel (0) target = $region13
  $region12: #{discriminator_forward.5} parent=0 // pred_region
    _
  $region13: #{discriminator_forward.5} parent=0 // pred_fallthru
    _
  // Predicated region
  $region14: #{discriminator_forward.5} parent=0 // pred_check
    _
  $region15: #{discriminator_forward.5} parent=0 // pred_check_branch
    %16 = sbr.rel (0) target = $region17
  $region16: #{discriminator_forward.5} parent=0 // pred_region
    _
  $region17: #{discriminator_forward.5} parent=0 // pred_fallthru
    _
  %v18 = vld [vmem:[%s0] sm:$0xf]
  %v19 = vld [vmem:[%s0 + $0x4] sm:$0xf]
  %v20 = vld [vmem:[%s1] sm:$0xff]
  %v21 = vld [vmem:[%s1 + $0x8] sm:$0xff]
  %v22 = vld [vmem:[%s1 + $0x10] sm:$0xff]
  %v23 = vld [vmem:[%s1 + $0x18] sm:$0xff]
  %v24 = vld [vmem:[%s1 + $0x20] sm:$0xff]
  %v25 = vld [vmem:[%s1 + $0x28] sm:$0xff]
  %v26 = vld [vmem:[%s1 + $0x30] sm:$0xff]
  %v27 = vld [vmem:[%s1 + $0x38] sm:$0xff]
  %v28 = vld [vmem:[%s1 + $0x40] sm:$0xff]
  %v29 = vld [vmem:[%s1 + $0x48] sm:$0xff]
  %v30 = vld [vmem:[%s1 + $0x50] sm:$0xff]
  %v31 = vld [vmem:[%s1 + $0x58] sm:$0xff]
  %v32 = vld [vmem:[%s1 + $0x60] sm:$0xff]
  %v33 = vld [vmem:[%s1 + $0x68] sm:$0xff]
  %v34 = vld [vmem:[%s1 + $0x70] sm:$0xff]
  %v35 = vld [vmem:[%s1 + $0x78] sm:$0xff]
  %v36 = vld [vmem:[%s1 + $0x80] sm:$0xff]
  %v37 = vld [vmem:[%s1 + $0x88] sm:$0xff]
  %v38 = vld [vmem:[%s1 + $0x90] sm:$0xff]
  %v39 = vld [vmem:[%s1 + $0x98] sm:$0xff]
  %v40 = vld [vmem:[%s1 + $0xa0] sm:$0xff]
  %v41 = vld [vmem:[%s1 + $0xa8] sm:$0xff]
  %v42 = vld [vmem:[%s1 + $0xb0] sm:$0xff]
  %v43 = vld [vmem:[%s1 + $0xb8] sm:$0xff]
  %v44 = vld [vmem:[%s1 + $0xc0] sm:$0xff]
  %v45 = vld [vmem:[%s1 + $0xc8] sm:$0xff]
  %v46 = vld [vmem:[%s1 + $0xd0] sm:$0xff]
  %v47 = vld [vmem:[%s1 + $0xd8] sm:$0xff]
  %v48 = vld [vmem:[%s1 + $0xe0] sm:$0xff]
  %v49 = vld [vmem:[%s1 + $0xe8] sm:$0xff]
  %v50 = vld [vmem:[%s1 + $0xf0] sm:$0xff]
  %v51 = vld [vmem:[%s1 + $0xf8] sm:$0xff]
  %v54 = vunpack.c.l.b16 %v18
  %v55 = vunpack.c.l.b16 %v19
  %v56 = vpack.c.b16 %v55, %v54
  %v90 = vunpack.c.l.b16 %v20
  %v91 = vunpack.c.h.b16 %v20
  %v92 = vunpack.c.l.b16 %v21
  %v93 = vunpack.c.h.b16 %v21
  %v94 = vunpack.c.l.b16 %v22
  %v95 = vunpack.c.h.b16 %v22
  %v96 = vunpack.c.l.b16 %v23
  %v97 = vunpack.c.h.b16 %v23
  %v98 = vunpack.c.l.b16 %v24
  %v99 = vunpack.c.h.b16 %v24
  %v100 = vunpack.c.l.b16 %v25
  %v101 = vunpack.c.h.b16 %v25
  %v102 = vunpack.c.l.b16 %v26
  %v103 = vunpack.c.h.b16 %v26
  %v104 = vunpack.c.l.b16 %v27
  %v105 = vunpack.c.h.b16 %v27
  %v106 = vunpack.c.l.b16 %v28
  %v107 = vunpack.c.h.b16 %v28
  %v108 = vunpack.c.l.b16 %v29
  %v109 = vunpack.c.h.b16 %v29
  %v110 = vunpack.c.l.b16 %v30
  %v111 = vunpack.c.h.b16 %v30
  %v112 = vunpack.c.l.b16 %v31
  %v113 = vunpack.c.h.b16 %v31
  %v114 = vunpack.c.l.b16 %v32
  %v115 = vunpack.c.h.b16 %v32
  %v116 = vunpack.c.l.b16 %v33
  %v117 = vunpack.c.h.b16 %v33
  %v118 = vunpack.c.l.b16 %v34
  %v119 = vunpack.c.h.b16 %v34
  %v120 = vunpack.c.l.b16 %v35
  %v121 = vunpack.c.h.b16 %v35
  %v122 = vunpack.c.l.b16 %v36
  %v123 = vunpack.c.h.b16 %v36
  %v124 = vunpack.c.l.b16 %v37
  %v125 = vunpack.c.h.b16 %v37
  %v126 = vunpack.c.l.b16 %v38
  %v127 = vunpack.c.h.b16 %v38
  %v128 = vunpack.c.l.b16 %v39
  %v129 = vunpack.c.h.b16 %v39
  %v130 = vunpack.c.l.b16 %v40
  %v131 = vunpack.c.h.b16 %v40
  %v132 = vunpack.c.l.b16 %v41
  %v133 = vunpack.c.h.b16 %v41
  %v134 = vunpack.c.l.b16 %v42
  %v135 = vunpack.c.h.b16 %v42
  %v136 = vunpack.c.l.b16 %v43
  %v137 = vunpack.c.h.b16 %v43
  %v138 = vunpack.c.l.b16 %v44
  %v139 = vunpack.c.h.b16 %v44
  %v140 = vunpack.c.l.b16 %v45
  %v141 = vunpack.c.h.b16 %v45
  %v142 = vunpack.c.l.b16 %v46
  %v143 = vunpack.c.h.b16 %v46
  %v144 = vunpack.c.l.b16 %v47
  %v145 = vunpack.c.h.b16 %v47
  %v146 = vunpack.c.l.b16 %v48
  %v147 = vunpack.c.h.b16 %v48
  %v148 = vunpack.c.l.b16 %v49
  %v149 = vunpack.c.h.b16 %v49
  %v150 = vunpack.c.l.b16 %v50
  %v151 = vunpack.c.h.b16 %v50
  %v152 = vunpack.c.l.b16 %v51
  %v153 = vunpack.c.h.b16 %v51
  %v154 = vpack.c.b16 %v94, %v90
  %v155 = vpack.c.b16 %v95, %v91
  %v156 = vpack.c.b16 %v96, %v92
  %v157 = vpack.c.b16 %v97, %v93
  %v158 = vpack.c.b16 %v102, %v98
  %v159 = vpack.c.b16 %v103, %v99
  %v160 = vpack.c.b16 %v104, %v100
  %v161 = vpack.c.b16 %v105, %v101
  %v162 = vpack.c.b16 %v110, %v106
  %v163 = vpack.c.b16 %v111, %v107
  %v164 = vpack.c.b16 %v112, %v108
  %v165 = vpack.c.b16 %v113, %v109
  %v166 = vpack.c.b16 %v118, %v114
  %v167 = vpack.c.b16 %v119, %v115
  %v168 = vpack.c.b16 %v120, %v116
  %v169 = vpack.c.b16 %v121, %v117
  %v170 = vpack.c.b16 %v126, %v122
  %v171 = vpack.c.b16 %v127, %v123
  %v172 = vpack.c.b16 %v128, %v124
  %v173 = vpack.c.b16 %v129, %v125
  %v174 = vpack.c.b16 %v134, %v130
  %v175 = vpack.c.b16 %v135, %v131
  %v176 = vpack.c.b16 %v136, %v132
  %v177 = vpack.c.b16 %v137, %v133
  %v178 = vpack.c.b16 %v142, %v138
  %v179 = vpack.c.b16 %v143, %v139
  %v180 = vpack.c.b16 %v144, %v140
  %v181 = vpack.c.b16 %v145, %v141
  %v182 = vpack.c.b16 %v150, %v146
  %v183 = vpack.c.b16 %v151, %v147
  %v184 = vpack.c.b16 %v152, %v148
  %v185 = vpack.c.b16 %v153, %v149
  %218 = vmatprep.subr.bf16.mxu0 %v155
  %219 = vmatpush1.bf16.msra.mxu0 %v154
  %220 = vmatprep.subr.bf16.mxu0 %v159
  %221 = vmatpush1.bf16.msra.mxu0 %v158
  %222 = vmatprep.subr.bf16.mxu0 %v163
  %223 = vmatpush1.bf16.msra.mxu0 %v162
  %224 = vmatprep.subr.bf16.mxu0 %v167
  %225 = vmatpush1.bf16.msra.mxu0 %v166
  %226 = vmatprep.subr.bf16.mxu0 %v171
  %227 = vmatpush1.bf16.msra.mxu0 %v170
  %228 = vmatprep.subr.bf16.mxu0 %v175
  %229 = vmatpush1.bf16.msra.mxu0 %v174
  %230 = vmatprep.subr.bf16.mxu0 %v179
  %231 = vmatpush1.bf16.msra.mxu0 %v178
  %232 = vmatprep.subr.bf16.mxu0 %v183
  %233 = vmatpush1.bf16.msra.mxu0 %v182
  %234 = vmatprep.subr.bf16.mxu0 0
  %235 = vmatpush1.bf16.msra.mxu0 0
  %236 = vmatprep.subr.bf16.mxu0 0
  %237 = vmatpush1.bf16.msra.mxu0 0
  %238 = vmatprep.subr.bf16.mxu0 0
  %239 = vmatpush1.bf16.msra.mxu0 0
  %240 = vmatprep.subr.bf16.mxu0 0
  %241 = vmatpush1.bf16.msra.mxu0 0
  %242 = vmatprep.subr.bf16.mxu0 0
  %243 = vmatpush1.bf16.msra.mxu0 0
  %244 = vmatprep.subr.bf16.mxu0 0
  %245 = vmatpush1.bf16.msra.mxu0 0
  %246 = vmatprep.subr.bf16.mxu0 0
  %247 = vmatpush1.bf16.msra.mxu0 0
  %248 = vmatprep.subr.bf16.mxu0 0
  %249 = vmatpush1.bf16.msra.mxu0 0
  %250 = vmatprep.mubr.bf16.mxu0 0
  %251 = vmatmul.mubr.bf16.gmra.mrb[0].mxu0 %v56
  %v252 = vpop.f32.mrb[0].mxu0
  %v253 = vadd.f32 0.0, %v252
  %v254 = vpop.f32.mrb[0].mxu0
  %v255 = vadd.f32 0.0, %v254
  %v256 = vpop.f32.mrb[0].mxu0
  %v257 = vadd.f32 0.0, %v256
  %v258 = vpop.f32.mrb[0].mxu0
  %v259 = vadd.f32 0.0, %v258
  %260 = vdwg.mxu0
  %261 = vmatprep.subr.bf16.mxu0 %v157
  %262 = vmatpush1.bf16.msra.mxu0 %v156
  %263 = vmatprep.subr.bf16.mxu0 %v161
  %264 = vmatpush1.bf16.msra.mxu0 %v160
  %265 = vmatprep.subr.bf16.mxu0 %v165
  %266 = vmatpush1.bf16.msra.mxu0 %v164
  %267 = vmatprep.subr.bf16.mxu0 %v169
  %268 = vmatpush1.bf16.msra.mxu0 %v168
  %269 = vmatprep.subr.bf16.mxu0 %v173
  %270 = vmatpush1.bf16.msra.mxu0 %v172
  %271 = vmatprep.subr.bf16.mxu0 %v177
  %272 = vmatpush1.bf16.msra.mxu0 %v176
  %273 = vmatprep.subr.bf16.mxu0 %v181
  %274 = vmatpush1.bf16.msra.mxu0 %v180
  %275 = vmatprep.subr.bf16.mxu0 %v185
  %276 = vmatpush1.bf16.msra.mxu0 %v184
  %277 = vmatprep.subr.bf16.mxu0 0
  %278 = vmatpush1.bf16.msra.mxu0 0
  %279 = vmatprep.subr.bf16.mxu0 0
  %280 = vmatpush1.bf16.msra.mxu0 0
  %281 = vmatprep.subr.bf16.mxu0 0
  %282 = vmatpush1.bf16.msra.mxu0 0
  %283 = vmatprep.subr.bf16.mxu0 0
  %284 = vmatpush1.bf16.msra.mxu0 0
  %285 = vmatprep.subr.bf16.mxu0 0
  %286 = vmatpush1.bf16.msra.mxu0 0
  %287 = vmatprep.subr.bf16.mxu0 0
  %288 = vmatpush1.bf16.msra.mxu0 0
  %289 = vmatprep.subr.bf16.mxu0 0
  %290 = vmatpush1.bf16.msra.mxu0 0
  %291 = vmatprep.subr.bf16.mxu0 0
  %292 = vmatpush1.bf16.msra.mxu0 0
  %293 = vmatprep.mubr.bf16.mxu0 0
  %294 = vmatmul.mubr.bf16.gmra.mrb[0].mxu0 %v56
  %v295 = vpop.f32.mrb[0].mxu0
  %v296 = vadd.f32 0.0, %v295
  %v297 = vpop.f32.mrb[0].mxu0
  %v298 = vadd.f32 0.0, %v297
  %v299 = vpop.f32.mrb[0].mxu0
  %v300 = vadd.f32 0.0, %v299
  %v301 = vpop.f32.mrb[0].mxu0
  %v302 = vadd.f32 0.0, %v301
  %303 = vdwg.mxu0
  %v304 = vadd.f32 %v253, %v255
  %v305 = vadd.f32 %v304, %v296
  %v306 = vadd.f32 %v305, %v298
  %307 = vadd.xlane.f32.xlu0 %v306
  %v308 = vpop.xlane.xlu0 %307
  %v309 = vadd.f32 %v257, %v259
  %v310 = vadd.f32 %v309, %v300
  %v311 = vadd.f32 %v310, %v302
  %312 = vadd.xlane.f32.xlu0 %v311
  %v313 = vpop.xlane.xlu0 %312
  %v314 = vrcp.pop 512.0
  %v315 = vmul.f32 %v308, %v314
  %v316 = vmul.f32 %v313, %v314
  %v317 = vsub.f32 %v253, %v315
  %v318 = vsub.f32 %v255, %v315
  %v319 = vsub.f32 %v296, %v315
  %v320 = vsub.f32 %v298, %v315
  %v321 = vsub.f32 %v257, %v316
  %v322 = vsub.f32 %v259, %v316
  %v323 = vsub.f32 %v300, %v316
  %v324 = vsub.f32 %v302, %v316
  %v325 = vmul.f32 %v317, %v317
  %v326 = vmul.f32 %v318, %v318
  %v327 = vmul.f32 %v319, %v319
  %v328 = vmul.f32 %v320, %v320
  %v329 = vmul.f32 %v321, %v321
  %v330 = vmul.f32 %v322, %v322
  %v331 = vmul.f32 %v323, %v323
  %v332 = vmul.f32 %v324, %v324
  %v333 = vadd.f32 %v325, %v326
  %v334 = vadd.f32 %v333, %v327
  %v335 = vadd.f32 %v334, %v328
  %336 = vadd.xlane.f32.xlu0 %v335
  %v337 = vpop.xlane.xlu0 %336
  %v338 = vadd.f32 %v329, %v330
  %v339 = vadd.f32 %v338, %v331
  %v340 = vadd.f32 %v339, %v332
  %341 = vadd.xlane.f32.xlu0 %v340
  %v342 = vpop.xlane.xlu0 %341
  %v343 = vmul.f32 %v337, %v314
  %v344 = vmul.f32 %v342, %v314
  %v345 = vadd.f32 %v343, 1e-05
  %v346 = vadd.f32 %v344, 1e-05
  %v347 = vrsqrt.pop %v345
  %v348 = vrsqrt.pop %v346
  %v349 = vmul.f32 %v317, %v347
  %v350 = vmul.f32 %v318, %v347
  %v351 = vmul.f32 %v319, %v347
  %v352 = vmul.f32 %v320, %v347
  %v353 = vmul.f32 %v321, %v348
  %v354 = vmul.f32 %v322, %v348
  %v355 = vmul.f32 %v323, %v348
  %v356 = vmul.f32 %v324, %v348
  %v357 = vld [vmem:[%s2] sm:$0xff]
  %v358 = vld [vmem:[%s2 + $0x8] sm:$0xff]
  %360 = vset.pattern.permute.xlu0 0
  %361 = vperm.xlu0 %360, %v357
  %v362 = vpop.permute.xlu0 %361
  %365 = vset.pattern.permute.xlu0 0
  %366 = vperm.xlu0 %365, %v358
  %v367 = vpop.permute.xlu0 %366
  %v369 = vmul.f32 %v349, %v362
  %v370 = vmul.f32 %v350, %v362
  %v371 = vmul.f32 %v351, %v362
  %v372 = vmul.f32 %v352, %v362
  %v373 = vmul.f32 %v353, %v367
  %v374 = vmul.f32 %v354, %v367
  %v375 = vmul.f32 %v355, %v367
  %v376 = vmul.f32 %v356, %v367
  %v377 = vld [vmem:[%s3] sm:$0xff]
  %v378 = vld [vmem:[%s3 + $0x8] sm:$0xff]
  %380 = vset.pattern.permute.xlu0 0
  %381 = vperm.xlu0 %380, %v377
  %v382 = vpop.permute.xlu0 %381
  %385 = vset.pattern.permute.xlu0 0
  %386 = vperm.xlu0 %385, %v378
  %v387 = vpop.permute.xlu0 %386
  %v389 = vadd.f32 %v369, %v382
  %v390 = vadd.f32 %v370, %v382
  %v391 = vadd.f32 %v371, %v382
  %v392 = vadd.f32 %v372, %v382
  %v393 = vadd.f32 %v373, %v387
  %v394 = vadd.f32 %v374, %v387
  %v395 = vadd.f32 %v375, %v387
  %v396 = vadd.f32 %v376, %v387
  %vm397 = vcmp.gt.f32.partialorder %v389, 0.0
  %vm398 = vcmp.gt.f32.partialorder %v390, 0.0
  %vm399 = vcmp.gt.f32.partialorder %v391, 0.0
  %vm400 = vcmp.gt.f32.partialorder %v392, 0.0
  %vm401 = vcmp.gt.f32.partialorder %v393, 0.0
  %vm402 = vcmp.gt.f32.partialorder %v394, 0.0
  %vm403 = vcmp.gt.f32.partialorder %v395, 0.0
  %vm404 = vcmp.gt.f32.partialorder %v396, 0.0
  %v405 = vmul.f32 %v389, 0.2
  %v406 = vmul.f32 %v390, 0.2
  %v407 = vmul.f32 %v391, 0.2
  %v408 = vmul.f32 %v392, 0.2
  %v409 = vmul.f32 %v393, 0.2
  %v410 = vmul.f32 %v394, 0.2
  %v411 = vmul.f32 %v395, 0.2
  %v412 = vmul.f32 %v396, 0.2
  %v413 = vsel %vm397, %v389, %v405
  %v414 = vsel %vm398, %v390, %v406
  %v415 = vsel %vm399, %v391, %v407
  %v416 = vsel %vm400, %v392, %v408
  %v417 = vsel %vm401, %v393, %v409
  %v418 = vsel %vm402, %v394, %v410
  %v419 = vsel %vm403, %v395, %v411
  %v420 = vsel %vm404, %v396, %v412
  %v421 = vpack.c.bf16 %v417, %v413
  %v422 = vpack.c.bf16 %v418, %v414
  %v423 = vpack.c.bf16 %v419, %v415
  %v424 = vpack.c.bf16 %v420, %v416
  %v429 = vunpack.c.l.b16 %v421
  %v430 = vunpack.c.l.b16 %v422
  %v431 = vunpack.c.l.b16 %v423
  %v432 = vunpack.c.l.b16 %v424
  %v433 = vunpack.c.h.b16 %v421
  %v434 = vunpack.c.h.b16 %v422
  %v435 = vunpack.c.h.b16 %v423
  %v436 = vunpack.c.h.b16 %v424
  %v437 = vpack.c.b16 %v430, %v429
  %v438 = vpack.c.b16 %v432, %v431
  %v439 = vpack.c.b16 %v434, %v433
  %v440 = vpack.c.b16 %v436, %v435
  %445 = vst [vmem:[%s4] sm:$0xff] %v437
  %446 = vst [vmem:[%s4 + $0x8] sm:$0xff] %v438
  %447 = vst [vmem:[%s4 + $0x10] sm:$0xff] %v439
  %448 = vst [vmem:[%s4 + $0x18] sm:$0xff] %v440
  // Predicated region
  $region18: #{discriminator_forward.5} parent=0 // pred_check
    _
  $region19: #{discriminator_forward.5} parent=0 // pred_check_branch
    %450 = sbr.rel (0) target = $region21
  $region20: #{discriminator_forward.5} parent=0 // pred_region
    _
  $region21: #{discriminator_forward.5} parent=0 // pred_fallthru
    _
  // Predicated region
  $region22: #{discriminator_forward.5} parent=0 // pred_check
    _
  $region23: #{discriminator_forward.5} parent=0 // pred_check_branch
    %452 = sbr.rel (0) target = $region25
  $region24: #{discriminator_forward.5} parent=0 // pred_region
    _
  $region25: #{discriminator_forward.5} parent=0 // pred_fallthru
    _

// kernel: discriminator_forward.6
$region0: #{discriminator_forward.6}
  #allocation0 [shape = 'u32[]', space=smem, size = 0x4, offset = 0x4, fixed_abs, tag = 'smem constant byte address 0x4 - core index']
  #allocation1 [shape = 'u32[144,128]{1,0:T(1,128)}', space=vmem, size = 0x12000, scoped, tag = 'internal scratch']
  %s0 = inlined_call_operand.vmem [shape: bf16[32,256], index: 0, kind: input, shape index: {}]
  %s1 = inlined_call_operand.vmem [shape: bf16[256,128], index: 1, kind: input, shape index: {}]
  %s2 = inlined_call_operand.vmem [shape: f32[32,1], index: 2, kind: input, shape index: {}]
  %s3 = inlined_call_operand.vmem [shape: f32[32,1], index: 3, kind: input, shape index: {}]
  %s4 = inlined_call_operand.vmem [shape: bf16[32,128], index: 4, kind: output, shape index: {}]
  %s5 = sld [smem:[#allocation0]]
  $region26: #{discriminator_forward.6} parent=0
    _
  %s7 = ssub.s32 1, %s5
  %s8 = scalar_select 0, %s7, %s5
  // Predicated region
  $region2: #{discriminator_forward.6} parent=0 // pred_check
    _
  $region3: #{discriminator_forward.6} parent=0 // pred_check_branch
    %10 = sbr.rel (0) target = $region5
  $region4: #{discriminator_forward.6} parent=0 // pred_region
    _
  $region5: #{discriminator_forward.6} parent=0 // pred_fallthru
    _
  // Predicated region
  $region6: #{discriminator_forward.6} parent=0 // pred_check
    _
  $region7: #{discriminator_forward.6} parent=0 // pred_check_branch
    %12 = sbr.rel (0) target = $region9
  $region8: #{discriminator_forward.6} parent=0 // pred_region
    _
  $region9: #{discriminator_forward.6} parent=0 // pred_fallthru
    _
  // Predicated region
  $region10: #{discriminator_forward.6} parent=0 // pred_check
    _
  $region11: #{discriminator_forward.6} parent=0 // pred_check_branch
    %14 = sbr.rel (0) target = $region13
  $region12: #{discriminator_forward.6} parent=0 // pred_region
    _
  $region13: #{discriminator_forward.6} parent=0 // pred_fallthru
    _
  // Predicated region
  $region14: #{discriminator_forward.6} parent=0 // pred_check
    _
  $region15: #{discriminator_forward.6} parent=0 // pred_check_branch
    %16 = sbr.rel (0) target = $region17
  $region16: #{discriminator_forward.6} parent=0 // pred_region
    _
  $region17: #{discriminator_forward.6} parent=0 // pred_fallthru
    _
  %v18 = vld [vmem:[%s0] sm:$0xff]
  %v19 = vld [vmem:[%s0 + $0x8] sm:$0xff]
  %v20 = vld [vmem:[%s0 + $0x10] sm:$0xff]
  %v21 = vld [vmem:[%s0 + $0x18] sm:$0xff]
  %v22 = vld [vmem:[%s1] sm:$0xf]
  %v23 = vld [vmem:[%s1 + $0x4] sm:$0xf]
  %v24 = vld [vmem:[%s1 + $0x8] sm:$0xf]
  %v25 = vld [vmem:[%s1 + $0xc] sm:$0xf]
  %v26 = vld [vmem:[%s1 + $0x10] sm:$0xf]
  %v27 = vld [vmem:[%s1 + $0x14] sm:$0xf]
  %v28 = vld [vmem:[%s1 + $0x18] sm:$0xf]
  %v29 = vld [vmem:[%s1 + $0x1c] sm:$0xf]
  %v30 = vld [vmem:[%s1 + $0x20] sm:$0xf]
  %v31 = vld [vmem:[%s1 + $0x24] sm:$0xf]
  %v32 = vld [vmem:[%s1 + $0x28] sm:$0xf]
  %v33 = vld [vmem:[%s1 + $0x2c] sm:$0xf]
  %v34 = vld [vmem:[%s1 + $0x30] sm:$0xf]
  %v35 = vld [vmem:[%s1 + $0x34] sm:$0xf]
  %v36 = vld [vmem:[%s1 + $0x38] sm:$0xf]
  %v37 = vld [vmem:[%s1 + $0x3c] sm:$0xf]
  %v38 = vld [vmem:[%s1 + $0x40] sm:$0xf]
  %v39 = vld [vmem:[%s1 + $0x44] sm:$0xf]
  %v40 = vld [vmem:[%s1 + $0x48] sm:$0xf]
  %v41 = vld [vmem:[%s1 + $0x4c] sm:$0xf]
  %v42 = vld [vmem:[%s1 + $0x50] sm:$0xf]
  %v43 = vld [vmem:[%s1 + $0x54] sm:$0xf]
  %v44 = vld [vmem:[%s1 + $0x58] sm:$0xf]
  %v45 = vld [vmem:[%s1 + $0x5c] sm:$0xf]
  %v46 = vld [vmem:[%s1 + $0x60] sm:$0xf]
  %v47 = vld [vmem:[%s1 + $0x64] sm:$0xf]
  %v48 = vld [vmem:[%s1 + $0x68] sm:$0xf]
  %v49 = vld [vmem:[%s1 + $0x6c] sm:$0xf]
  %v50 = vld [vmem:[%s1 + $0x70] sm:$0xf]
  %v51 = vld [vmem:[%s1 + $0x74] sm:$0xf]
  %v52 = vld [vmem:[%s1 + $0x78] sm:$0xf]
  %v53 = vld [vmem:[%s1 + $0x7c] sm:$0xf]
  %v58 = vunpack.c.l.b16 %v18
  %v59 = vunpack.c.h.b16 %v18
  %v60 = vunpack.c.l.b16 %v19
  %v61 = vunpack.c.h.b16 %v19
  %v62 = vunpack.c.l.b16 %v20
  %v63 = vunpack.c.h.b16 %v20
  %v64 = vunpack.c.l.b16 %v21
  %v65 = vunpack.c.h.b16 %v21
  %v66 = vpack.c.b16 %v60, %v58
  %v67 = vpack.c.b16 %v61, %v59
  %v68 = vpack.c.b16 %v64, %v62
  %v69 = vpack.c.b16 %v65, %v63
  %v106 = vunpack.c.l.b16 %v22
  %v107 = vunpack.c.l.b16 %v23
  %v108 = vunpack.c.l.b16 %v24
  %v109 = vunpack.c.l.b16 %v25
  %v110 = vunpack.c.l.b16 %v26
  %v111 = vunpack.c.l.b16 %v27
  %v112 = vunpack.c.l.b16 %v28
  %v113 = vunpack.c.l.b16 %v29
  %v114 = vunpack.c.l.b16 %v30
  %v115 = vunpack.c.l.b16 %v31
  %v116 = vunpack.c.l.b16 %v32
  %v117 = vunpack.c.l.b16 %v33
  %v118 = vunpack.c.l.b16 %v34
  %v119 = vunpack.c.l.b16 %v35
  %v120 = vunpack.c.l.b16 %v36
  %v121 = vunpack.c.l.b16 %v37
  %v122 = vunpack.c.l.b16 %v38
  %v123 = vunpack.c.l.b16 %v39
  %v124 = vunpack.c.l.b16 %v40
  %v125 = vunpack.c.l.b16 %v41
  %v126 = vunpack.c.l.b16 %v42
  %v127 = vunpack.c.l.b16 %v43
  %v128 = vunpack.c.l.b16 %v44
  %v129 = vunpack.c.l.b16 %v45
  %v130 = vunpack.c.l.b16 %v46
  %v131 = vunpack.c.l.b16 %v47
  %v132 = vunpack.c.l.b16 %v48
  %v133 = vunpack.c.l.b16 %v49
  %v134 = vunpack.c.l.b16 %v50
  %v135 = vunpack.c.l.b16 %v51
  %v136 = vunpack.c.l.b16 %v52
  %v137 = vunpack.c.l.b16 %v53
  %v138 = vpack.c.b16 %v107, %v106
  %v139 = vpack.c.b16 %v109, %v108
  %v140 = vpack.c.b16 %v111, %v110
  %v141 = vpack.c.b16 %v113, %v112
  %v142 = vpack.c.b16 %v115, %v114
  %v143 = vpack.c.b16 %v117, %v116
  %v144 = vpack.c.b16 %v119, %v118
  %v145 = vpack.c.b16 %v121, %v120
  %v146 = vpack.c.b16 %v123, %v122
  %v147 = vpack.c.b16 %v125, %v124
  %v148 = vpack.c.b16 %v127, %v126
  %v149 = vpack.c.b16 %v129, %v128
  %v150 = vpack.c.b16 %v131, %v130
  %v151 = vpack.c.b16 %v133, %v132
  %v152 = vpack.c.b16 %v135, %v134
  %v153 = vpack.c.b16 %v137, %v136
  %170 = vmatprep.subr.bf16.mxu0 0
  %171 = vmatpush1.bf16.msra.mxu0 %v138
  %172 = vmatprep.subr.bf16.mxu0 0
  %173 = vmatpush1.bf16.msra.mxu0 %v139
  %174 = vmatprep.subr.bf16.mxu0 0
  %175 = vmatpush1.bf16.msra.mxu0 %v140
  %176 = vmatprep.subr.bf16.mxu0 0
  %177 = vmatpush1.bf16.msra.mxu0 %v141
  %178 = vmatprep.subr.bf16.mxu0 0
  %179 = vmatpush1.bf16.msra.mxu0 %v142
  %180 = vmatprep.subr.bf16.mxu0 0
  %181 = vmatpush1.bf16.msra.mxu0 %v143
  %182 = vmatprep.subr.bf16.mxu0 0
  %183 = vmatpush1.bf16.msra.mxu0 %v144
  %184 = vmatprep.subr.bf16.mxu0 0
  %185 = vmatpush1.bf16.msra.mxu0 %v145
  %186 = vmatprep.subr.bf16.mxu0 0
  %187 = vmatpush1.bf16.msra.mxu0 %v146
  %188 = vmatprep.subr.bf16.mxu0 0
  %189 = vmatpush1.bf16.msra.mxu0 %v147
  %190 = vmatprep.subr.bf16.mxu0 0
  %191 = vmatpush1.bf16.msra.mxu0 %v148
  %192 = vmatprep.subr.bf16.mxu0 0
  %193 = vmatpush1.bf16.msra.mxu0 %v149
  %194 = vmatprep.subr.bf16.mxu0 0
  %195 = vmatpush1.bf16.msra.mxu0 %v150
  %196 = vmatprep.subr.bf16.mxu0 0
  %197 = vmatpush1.bf16.msra.mxu0 %v151
  %198 = vmatprep.subr.bf16.mxu0 0
  %199 = vmatpush1.bf16.msra.mxu0 %v152
  %200 = vmatprep.subr.bf16.mxu0 0
  %201 = vmatpush1.bf16.msra.mxu0 %v153
  %202 = vmatprep.mubr.bf16.mxu0 %v67
  %203 = vmatmul.mubr.bf16.gmra.mrb[0].mxu0 %v66
  %v204 = vpop.f32.mrb[0].mxu0
  %v205 = vadd.f32 0.0, %v204
  %v206 = vpop.f32.mrb[0].mxu0
  %v207 = vpop.f32.mrb[0].mxu0
  %v208 = vadd.f32 0.0, %v207
  %v209 = vpop.f32.mrb[0].mxu0
  %210 = vmatprep.mubr.bf16.mxu0 %v69
  %211 = vmatmul.mubr.bf16.gmra.mrb[0].mxu0 %v68
  %v212 = vpop.f32.mrb[0].mxu0
  %v213 = vadd.f32 0.0, %v212
  %v214 = vpop.f32.mrb[0].mxu0
  %v215 = vpop.f32.mrb[0].mxu0
  %v216 = vadd.f32 0.0, %v215
  %v217 = vpop.f32.mrb[0].mxu0
  %218 = vdwg.mxu0
  %219 = vadd.xlane.f32.xlu0 %v205
  %v220 = vpop.xlane.xlu0 %219
  %221 = vadd.xlane.f32.xlu0 %v208
  %v222 = vpop.xlane.xlu0 %221
  %223 = vadd.xlane.f32.xlu0 %v213
  %v224 = vpop.xlane.xlu0 %223
  %225 = vadd.xlane.f32.xlu0 %v216
  %v226 = vpop.xlane.xlu0 %225
  %v227 = vrcp.pop 128.0
  %v228 = vmul.f32 %v220, %v227
  %v229 = vmul.f32 %v222, %v227
  %v230 = vmul.f32 %v224, %v227
  %v231 = vmul.f32 %v226, %v227
  %v232 = vsub.f32 %v205, %v228
  %v233 = vsub.f32 %v208, %v229
  %v234 = vsub.f32 %v213, %v230
  %v235 = vsub.f32 %v216, %v231
  %v236 = vmul.f32 %v232, %v232
  %v237 = vmul.f32 %v233, %v233
  %v238 = vmul.f32 %v234, %v234
  %v239 = vmul.f32 %v235, %v235
  %240 = vadd.xlane.f32.xlu0 %v236
  %v241 = vpop.xlane.xlu0 %240
  %242 = vadd.xlane.f32.xlu0 %v237
  %v243 = vpop.xlane.xlu0 %242
  %244 = vadd.xlane.f32.xlu0 %v238
  %v245 = vpop.xlane.xlu0 %244
  %246 = vadd.xlane.f32.xlu0 %v239
  %v247 = vpop.xlane.xlu0 %246
  %v248 = vmul.f32 %v241, %v227
  %v249 = vmul.f32 %v243, %v227
  %v250 = vmul.f32 %v245, %v227
  %v251 = vmul.f32 %v247, %v227
  %v252 = vadd.f32 %v248, 1e-05
  %v253 = vadd.f32 %v249, 1e-05
  %v254 = vadd.f32 %v250, 1e-05
  %v255 = vadd.f32 %v251, 1e-05
  %v256 = vrsqrt.pop %v252
  %v257 = vrsqrt.pop %v253
  %v258 = vrsqrt.pop %v254
  %v259 = vrsqrt.pop %v255
  %v260 = vmul.f32 %v232, %v256
  %v261 = vmul.f32 %v233, %v257
  %v262 = vmul.f32 %v234, %v258
  %v263 = vmul.f32 %v235, %v259
  %v264 = vld [vmem:[%s2] sm:$0xff]
  %v265 = vld [vmem:[%s2 + $0x8] sm:$0xff]
  %v266 = vld [vmem:[%s2 + $0x10] sm:$0xff]
  %v267 = vld [vmem:[%s2 + $0x18] sm:$0xff]
  %269 = vset.pattern.permute.xlu0 0
  %270 = vperm.xlu0 %269, %v264
  %v271 = vpop.permute.xlu0 %270
  %274 = vset.pattern.permute.xlu0 0
  %275 = vperm.xlu0 %274, %v265
  %v276 = vpop.permute.xlu0 %275
  %279 = vset.pattern.permute.xlu0 0
  %280 = vperm.xlu0 %279, %v266
  %v281 = vpop.permute.xlu0 %280
  %284 = vset.pattern.permute.xlu0 0
  %285 = vperm.xlu0 %284, %v267
  %v286 = vpop.permute.xlu0 %285
  %v288 = vmul.f32 %v260, %v271
  %v289 = vmul.f32 %v261, %v276
  %v290 = vmul.f32 %v262, %v281
  %v291 = vmul.f32 %v263, %v286
  %v292 = vld [vmem:[%s3] sm:$0xff]
  %v293 = vld [vmem:[%s3 + $0x8] sm:$0xff]
  %v294 = vld [vmem:[%s3 + $0x10] sm:$0xff]
  %v295 = vld [vmem:[%s3 + $0x18] sm:$0xff]
  %297 = vset.pattern.permute.xlu0 0
  %298 = vperm.xlu0 %297, %v292
  %v299 = vpop.permute.xlu0 %298
  %302 = vset.pattern.permute.xlu0 0
  %303 = vperm.xlu0 %302, %v293
  %v304 = vpop.permute.xlu0 %303
  %307 = vset.pattern.permute.xlu0 0
  %308 = vperm.xlu0 %307, %v294
  %v309 = vpop.permute.xlu0 %308
  %312 = vset.pattern.permute.xlu0 0
  %313 = vperm.xlu0 %312, %v295
  %v314 = vpop.permute.xlu0 %313
  %v316 = vadd.f32 %v288, %v299
  %v317 = vadd.f32 %v289, %v304
  %v318 = vadd.f32 %v290, %v309
  %v319 = vadd.f32 %v291, %v314
  %vm320 = vcmp.gt.f32.partialorder %v316, 0.0
  %vm321 = vcmp.gt.f32.partialorder %v317, 0.0
  %vm322 = vcmp.gt.f32.partialorder %v318, 0.0
  %vm323 = vcmp.gt.f32.partialorder %v319, 0.0
  %v324 = vmul.f32 %v316, 0.2
  %v325 = vmul.f32 %v317, 0.2
  %v326 = vmul.f32 %v318, 0.2
  %v327 = vmul.f32 %v319, 0.2
  %v328 = vsel %vm320, %v316, %v324
  %v329 = vsel %vm321, %v317, %v325
  %v330 = vsel %vm322, %v318, %v326
  %v331 = vsel %vm323, %v319, %v327
  %v332 = vpack.c.bf16 %v329, %v328
  %v333 = vpack.c.bf16 %v331, %v330
  %v336 = vunpack.c.l.b16 %v332
  %v337 = vunpack.c.h.b16 %v332
  %v338 = vunpack.c.l.b16 %v333
  %v339 = vunpack.c.h.b16 %v333
  %v340 = vpack.c.b16 %v336, %v336
  %v341 = vpack.c.b16 %v337, %v337
  %v342 = vpack.c.b16 %v338, %v338
  %v343 = vpack.c.b16 %v339, %v339
  %348 = vst [vmem:[%s4] sm:$0xf] %v340
  %349 = vst [vmem:[%s4 + $0x4] sm:$0xf] %v341
  %350 = vst [vmem:[%s4 + $0x8] sm:$0xf] %v342
  %351 = vst [vmem:[%s4 + $0xc] sm:$0xf] %v343
  // Predicated region
  $region18: #{discriminator_forward.6} parent=0 // pred_check
    _
  $region19: #{discriminator_forward.6} parent=0 // pred_check_branch
    %353 = sbr.rel (0) target = $region21
  $region20: #{discriminator_forward.6} parent=0 // pred_region
    _
  $region21: #{discriminator_forward.6} parent=0 // pred_fallthru
    _
  // Predicated region
  $region22: #{discriminator_forward.6} parent=0 // pred_check
    _
  $region23: #{discriminator_forward.6} parent=0 // pred_check_branch
    %355 = sbr.rel (0) target = $region25
  $region24: #{discriminator_forward.6} parent=0 // pred_region
    _
  $region25: #{discriminator_forward.6} parent=0 // pred_fallthru
    _

// kernel: discriminator_forward.7
$region0: #{discriminator_forward.7}
  #allocation0 [shape = 'u32[]', space=smem, size = 0x4, offset = 0x4, fixed_abs, tag = 'smem constant byte address 0x4 - core index']
  #allocation1 [shape = 'u32[144,128]{1,0:T(1,128)}', space=vmem, size = 0x12000, scoped, tag = 'internal scratch']
  %s0 = inlined_call_operand.vmem [shape: bf16[64,512], index: 0, kind: input, shape index: {}]
  %s1 = inlined_call_operand.vmem [shape: bf16[512,32], index: 1, kind: input, shape index: {}]
  %s2 = inlined_call_operand.vmem [shape: f32[64,1], index: 2, kind: input, shape index: {}]
  %s3 = inlined_call_operand.vmem [shape: f32[64,1], index: 3, kind: input, shape index: {}]
  %s4 = inlined_call_operand.vmem [shape: f32[64,32], index: 4, kind: input, shape index: {}]
  %s5 = inlined_call_operand.vmem [shape: f32[2,32], index: 5, kind: input, shape index: {}]
  %s6 = inlined_call_operand.vmem [shape: f32[2,1], index: 6, kind: output, shape index: {}]
  %s7 = sld [smem:[#allocation0]]
  $region34: #{discriminator_forward.7} parent=0
    _
  %s9 = ssub.s32 1, %s7
  %s10 = scalar_select 0, %s9, %s7
  // Predicated region
  $region2: #{discriminator_forward.7} parent=0 // pred_check
    _
  $region3: #{discriminator_forward.7} parent=0 // pred_check_branch
    %12 = sbr.rel (0) target = $region5
  $region4: #{discriminator_forward.7} parent=0 // pred_region
    _
  $region5: #{discriminator_forward.7} parent=0 // pred_fallthru
    _
  // Predicated region
  $region6: #{discriminator_forward.7} parent=0 // pred_check
    _
  $region7: #{discriminator_forward.7} parent=0 // pred_check_branch
    %14 = sbr.rel (0) target = $region9
  $region8: #{discriminator_forward.7} parent=0 // pred_region
    _
  $region9: #{discriminator_forward.7} parent=0 // pred_fallthru
    _
  // Predicated region
  $region10: #{discriminator_forward.7} parent=0 // pred_check
    _
  $region11: #{discriminator_forward.7} parent=0 // pred_check_branch
    %16 = sbr.rel (0) target = $region13
  $region12: #{discriminator_forward.7} parent=0 // pred_region
    _
  $region13: #{discriminator_forward.7} parent=0 // pred_fallthru
    _
  // Predicated region
  $region14: #{discriminator_forward.7} parent=0 // pred_check
    _
  $region15: #{discriminator_forward.7} parent=0 // pred_check_branch
    %18 = sbr.rel (0) target = $region17
  $region16: #{discriminator_forward.7} parent=0 // pred_region
    _
  $region17: #{discriminator_forward.7} parent=0 // pred_fallthru
    _
  // Predicated region
  $region18: #{discriminator_forward.7} parent=0 // pred_check
    _
  $region19: #{discriminator_forward.7} parent=0 // pred_check_branch
    %20 = sbr.rel (0) target = $region21
  $region20: #{discriminator_forward.7} parent=0 // pred_region
    _
  $region21: #{discriminator_forward.7} parent=0 // pred_fallthru
    _
  // Predicated region
  $region22: #{discriminator_forward.7} parent=0 // pred_check
    _
  $region23: #{discriminator_forward.7} parent=0 // pred_check_branch
    %22 = sbr.rel (0) target = $region25
  $region24: #{discriminator_forward.7} parent=0 // pred_region
    _
  $region25: #{discriminator_forward.7} parent=0 // pred_fallthru
    _
  %v24 = vld [vmem:[%s0] sm:$0xff]
  %v25 = vld [vmem:[%s0 + $0x8] sm:$0xff]
  %v26 = vld [vmem:[%s0 + $0x10] sm:$0xff]
  %v27 = vld [vmem:[%s0 + $0x18] sm:$0xff]
  %v28 = vld [vmem:[%s0 + $0x20] sm:$0xff]
  %v29 = vld [vmem:[%s0 + $0x28] sm:$0xff]
  %v30 = vld [vmem:[%s0 + $0x30] sm:$0xff]
  %v31 = vld [vmem:[%s0 + $0x38] sm:$0xff]
  %v32 = vld [vmem:[%s0 + $0x40] sm:$0xff]
  %v33 = vld [vmem:[%s0 + $0x48] sm:$0xff]
  %v34 = vld [vmem:[%s0 + $0x50] sm:$0xff]
  %v35 = vld [vmem:[%s0 + $0x58] sm:$0xff]
  %v36 = vld [vmem:[%s0 + $0x60] sm:$0xff]
  %v37 = vld [vmem:[%s0 + $0x68] sm:$0xff]
  %v38 = vld [vmem:[%s0 + $0x70] sm:$0xff]
  %v39 = vld [vmem:[%s0 + $0x78] sm:$0xff]
  %v40 = vld [vmem:[%s1] sm:$0xf]
  %v41 = vld [vmem:[%s1 + $0x4] sm:$0xf]
  %v42 = vld [vmem:[%s1 + $0x8] sm:$0xf]
  %v43 = vld [vmem:[%s1 + $0xc] sm:$0xf]
  %v44 = vld [vmem:[%s1 + $0x10] sm:$0xf]
  %v45 = vld [vmem:[%s1 + $0x14] sm:$0xf]
  %v46 = vld [vmem:[%s1 + $0x18] sm:$0xf]
  %v47 = vld [vmem:[%s1 + $0x1c] sm:$0xf]
  %v48 = vld [vmem:[%s1 + $0x20] sm:$0xf]
  %v49 = vld [vmem:[%s1 + $0x24] sm:$0xf]
  %v50 = vld [vmem:[%s1 + $0x28] sm:$0xf]
  %v51 = vld [vmem:[%s1 + $0x2c] sm:$0xf]
  %v52 = vld [vmem:[%s1 + $0x30] sm:$0xf]
  %v53 = vld [vmem:[%s1 + $0x34] sm:$0xf]
  %v54 = vld [vmem:[%s1 + $0x38] sm:$0xf]
  %v55 = vld [vmem:[%s1 + $0x3c] sm:$0xf]
  %v56 = vld [vmem:[%s1 + $0x40] sm:$0xf]
  %v57 = vld [vmem:[%s1 + $0x44] sm:$0xf]
  %v58 = vld [vmem:[%s1 + $0x48] sm:$0xf]
  %v59 = vld [vmem:[%s1 + $0x4c] sm:$0xf]
  %v60 = vld [vmem:[%s1 + $0x50] sm:$0xf]
  %v61 = vld [vmem:[%s1 + $0x54] sm:$0xf]
  %v62 = vld [vmem:[%s1 + $0x58] sm:$0xf]
  %v63 = vld [vmem:[%s1 + $0x5c] sm:$0xf]
  %v64 = vld [vmem:[%s1 + $0x60] sm:$0xf]
  %v65 = vld [vmem:[%s1 + $0x64] sm:$0xf]
  %v66 = vld [vmem:[%s1 + $0x68] sm:$0xf]
  %v67 = vld [vmem:[%s1 + $0x6c] sm:$0xf]
  %v68 = vld [vmem:[%s1 + $0x70] sm:$0xf]
  %v69 = vld [vmem:[%s1 + $0x74] sm:$0xf]
  %v70 = vld [vmem:[%s1 + $0x78] sm:$0xf]
  %v71 = vld [vmem:[%s1 + $0x7c] sm:$0xf]
  %v72 = vld [vmem:[%s1 + $0x80] sm:$0xf]
  %v73 = vld [vmem:[%s1 + $0x84] sm:$0xf]
  %v74 = vld [vmem:[%s1 + $0x88] sm:$0xf]
  %v75 = vld [vmem:[%s1 + $0x8c] sm:$0xf]
  %v76 = vld [vmem:[%s1 + $0x90] sm:$0xf]
  %v77 = vld [vmem:[%s1 + $0x94] sm:$0xf]
  %v78 = vld [vmem:[%s1 + $0x98] sm:$0xf]
  %v79 = vld [vmem:[%s1 + $0x9c] sm:$0xf]
  %v80 = vld [vmem:[%s1 + $0xa0] sm:$0xf]
  %v81 = vld [vmem:[%s1 + $0xa4] sm:$0xf]
  %v82 = vld [vmem:[%s1 + $0xa8] sm:$0xf]
  %v83 = vld [vmem:[%s1 + $0xac] sm:$0xf]
  %v84 = vld [vmem:[%s1 + $0xb0] sm:$0xf]
  %v85 = vld [vmem:[%s1 + $0xb4] sm:$0xf]
  %v86 = vld [vmem:[%s1 + $0xb8] sm:$0xf]
  %v87 = vld [vmem:[%s1 + $0xbc] sm:$0xf]
  %v88 = vld [vmem:[%s1 + $0xc0] sm:$0xf]
  %v89 = vld [vmem:[%s1 + $0xc4] sm:$0xf]
  %v90 = vld [vmem:[%s1 + $0xc8] sm:$0xf]
  %v91 = vld [vmem:[%s1 + $0xcc] sm:$0xf]
  %v92 = vld [vmem:[%s1 + $0xd0] sm:$0xf]
  %v93 = vld [vmem:[%s1 + $0xd4] sm:$0xf]
  %v94 = vld [vmem:[%s1 + $0xd8] sm:$0xf]
  %v95 = vld [vmem:[%s1 + $0xdc] sm:$0xf]
  %v96 = vld [vmem:[%s1 + $0xe0] sm:$0xf]
  %v97 = vld [vmem:[%s1 + $0xe4] sm:$0xf]
  %v98 = vld [vmem:[%s1 + $0xe8] sm:$0xf]
  %v99 = vld [vmem:[%s1 + $0xec] sm:$0xf]
  %v100 = vld [vmem:[%s1 + $0xf0] sm:$0xf]
  %v101 = vld [vmem:[%s1 + $0xf4] sm:$0xf]
  %v102 = vld [vmem:[%s1 + $0xf8] sm:$0xf]
  %v103 = vld [vmem:[%s1 + $0xfc] sm:$0xf]
  %v120 = vunpack.c.l.b16 %v24
  %v121 = vunpack.c.h.b16 %v24
  %v122 = vunpack.c.l.b16 %v25
  %v123 = vunpack.c.h.b16 %v25
  %v124 = vunpack.c.l.b16 %v26
  %v125 = vunpack.c.h.b16 %v26
  %v126 = vunpack.c.l.b16 %v27
  %v127 = vunpack.c.h.b16 %v27
  %v128 = vunpack.c.l.b16 %v28
  %v129 = vunpack.c.h.b16 %v28
  %v130 = vunpack.c.l.b16 %v29
  %v131 = vunpack.c.h.b16 %v29
  %v132 = vunpack.c.l.b16 %v30
  %v133 = vunpack.c.h.b16 %v30
  %v134 = vunpack.c.l.b16 %v31
  %v135 = vunpack.c.h.b16 %v31
  %v136 = vunpack.c.l.b16 %v32
  %v137 = vunpack.c.h.b16 %v32
  %v138 = vunpack.c.l.b16 %v33
  %v139 = vunpack.c.h.b16 %v33
  %v140 = vunpack.c.l.b16 %v34
  %v141 = vunpack.c.h.b16 %v34
  %v142 = vunpack.c.l.b16 %v35
  %v143 = vunpack.c.h.b16 %v35
  %v144 = vunpack.c.l.b16 %v36
  %v145 = vunpack.c.h.b16 %v36
  %v146 = vunpack.c.l.b16 %v37
  %v147 = vunpack.c.h.b16 %v37
  %v148 = vunpack.c.l.b16 %v38
  %v149 = vunpack.c.h.b16 %v38
  %v150 = vunpack.c.l.b16 %v39
  %v151 = vunpack.c.h.b16 %v39
  %v152 = vpack.c.b16 %v124, %v120
  %v153 = vpack.c.b16 %v125, %v121
  %v154 = vpack.c.b16 %v126, %v122
  %v155 = vpack.c.b16 %v127, %v123
  %v156 = vpack.c.b16 %v132, %v128
  %v157 = vpack.c.b16 %v133, %v129
  %v158 = vpack.c.b16 %v134, %v130
  %v159 = vpack.c.b16 %v135, %v131
  %v160 = vpack.c.b16 %v140, %v136
  %v161 = vpack.c.b16 %v141, %v137
  %v162 = vpack.c.b16 %v142, %v138
  %v163 = vpack.c.b16 %v143, %v139
  %v164 = vpack.c.b16 %v148, %v144
  %v165 = vpack.c.b16 %v149, %v145
  %v166 = vpack.c.b16 %v150, %v146
  %v167 = vpack.c.b16 %v151, %v147
  %v248 = vunpack.c.l.b16 %v40
  %v249 = vunpack.c.l.b16 %v41
  %v250 = vunpack.c.l.b16 %v42
  %v251 = vunpack.c.l.b16 %v43
  %v252 = vunpack.c.l.b16 %v44
  %v253 = vunpack.c.l.b16 %v45
  %v254 = vunpack.c.l.b16 %v46
  %v255 = vunpack.c.l.b16 %v47
  %v256 = vunpack.c.l.b16 %v48
  %v257 = vunpack.c.l.b16 %v49
  %v258 = vunpack.c.l.b16 %v50
  %v259 = vunpack.c.l.b16 %v51
  %v260 = vunpack.c.l.b16 %v52
  %v261 = vunpack.c.l.b16 %v53
  %v262 = vunpack.c.l.b16 %v54
  %v263 = vunpack.c.l.b16 %v55
  %v264 = vunpack.c.l.b16 %v56
  %v265 = vunpack.c.l.b16 %v57
  %v266 = vunpack.c.l.b16 %v58
  %v267 = vunpack.c.l.b16 %v59
  %v268 = vunpack.c.l.b16 %v60
  %v269 = vunpack.c.l.b16 %v61
  %v270 = vunpack.c.l.b16 %v62
  %v271 = vunpack.c.l.b16 %v63
  %v272 = vunpack.c.l.b16 %v64
  %v273 = vunpack.c.l.b16 %v65
  %v274 = vunpack.c.l.b16 %v66
  %v275 = vunpack.c.l.b16 %v67
  %v276 = vunpack.c.l.b16 %v68
  %v277 = vunpack.c.l.b16 %v69
  %v278 = vunpack.c.l.b16 %v70
  %v279 = vunpack.c.l.b16 %v71
  %v280 = vunpack.c.l.b16 %v72
  %v281 = vunpack.c.l.b16 %v73
  %v282 = vunpack.c.l.b16 %v74
  %v283 = vunpack.c.l.b16 %v75
  %v284 = vunpack.c.l.b16 %v76
  %v285 = vunpack.c.l.b16 %v77
  %v286 = vunpack.c.l.b16 %v78
  %v287 = vunpack.c.l.b16 %v79
  %v288 = vunpack.c.l.b16 %v80
  %v289 = vunpack.c.l.b16 %v81
  %v290 = vunpack.c.l.b16 %v82
  %v291 = vunpack.c.l.b16 %v83
  %v292 = vunpack.c.l.b16 %v84
  %v293 = vunpack.c.l.b16 %v85
  %v294 = vunpack.c.l.b16 %v86
  %v295 = vunpack.c.l.b16 %v87
  %v296 = vunpack.c.l.b16 %v88
  %v297 = vunpack.c.l.b16 %v89
  %v298 = vunpack.c.l.b16 %v90
  %v299 = vunpack.c.l.b16 %v91
  %v300 = vunpack.c.l.b16 %v92
  %v301 = vunpack.c.l.b16 %v93
  %v302 = vunpack.c.l.b16 %v94
  %v303 = vunpack.c.l.b16 %v95
  %v304 = vunpack.c.l.b16 %v96
  %v305 = vunpack.c.l.b16 %v97
  %v306 = vunpack.c.l.b16 %v98
  %v307 = vunpack.c.l.b16 %v99
  %v308 = vunpack.c.l.b16 %v100
  %v309 = vunpack.c.l.b16 %v101
  %v310 = vunpack.c.l.b16 %v102
  %v311 = vunpack.c.l.b16 %v103
  %v312 = vpack.c.b16 %v249, %v248
  %v313 = vpack.c.b16 %v251, %v250
  %v314 = vpack.c.b16 %v253, %v252
  %v315 = vpack.c.b16 %v255, %v254
  %v316 = vpack.c.b16 %v257, %v256
  %v317 = vpack.c.b16 %v259, %v258
  %v318 = vpack.c.b16 %v261, %v260
  %v319 = vpack.c.b16 %v263, %v262
  %v320 = vpack.c.b16 %v265, %v264
  %v321 = vpack.c.b16 %v267, %v266
  %v322 = vpack.c.b16 %v269, %v268
  %v323 = vpack.c.b16 %v271, %v270
  %v324 = vpack.c.b16 %v273, %v272
  %v325 = vpack.c.b16 %v275, %v274
  %v326 = vpack.c.b16 %v277, %v276
  %v327 = vpack.c.b16 %v279, %v278
  %v328 = vpack.c.b16 %v281, %v280
  %v329 = vpack.c.b16 %v283, %v282
  %v330 = vpack.c.b16 %v285, %v284
  %v331 = vpack.c.b16 %v287, %v286
  %v332 = vpack.c.b16 %v289, %v288
  %v333 = vpack.c.b16 %v291, %v290
  %v334 = vpack.c.b16 %v293, %v292
  %v335 = vpack.c.b16 %v295, %v294
  %v336 = vpack.c.b16 %v297, %v296
  %v337 = vpack.c.b16 %v299, %v298
  %v338 = vpack.c.b16 %v301, %v300
  %v339 = vpack.c.b16 %v303, %v302
  %v340 = vpack.c.b16 %v305, %v304
  %v341 = vpack.c.b16 %v307, %v306
  %v342 = vpack.c.b16 %v309, %v308
  %v343 = vpack.c.b16 %v311, %v310
  %376 = vmatprep.subr.bf16.mxu0 0
  %377 = vmatpush1.bf16.msra.mxu0 %v312
  %378 = vmatprep.subr.bf16.mxu0 0
  %379 = vmatpush1.bf16.msra.mxu0 %v313
  %380 = vmatprep.subr.bf16.mxu0 0
  %381 = vmatpush1.bf16.msra.mxu0 %v314
  %382 = vmatprep.subr.bf16.mxu0 0
  %383 = vmatpush1.bf16.msra.mxu0 %v315
  %384 = vmatprep.subr.bf16.mxu0 0
  %385 = vmatpush1.bf16.msra.mxu0 %v316
  %386 = vmatprep.subr.bf16.mxu0 0
  %387 = vmatpush1.bf16.msra.mxu0 %v317
  %388 = vmatprep.subr.bf16.mxu0 0
  %389 = vmatpush1.bf16.msra.mxu0 %v318
  %390 = vmatprep.subr.bf16.mxu0 0
  %391 = vmatpush1.bf16.msra.mxu0 %v319
  %392 = vmatprep.subr.bf16.mxu0 0
  %393 = vmatpush1.bf16.msra.mxu0 %v320
  %394 = vmatprep.subr.bf16.mxu0 0
  %395 = vmatpush1.bf16.msra.mxu0 %v321
  %396 = vmatprep.subr.bf16.mxu0 0
  %397 = vmatpush1.bf16.msra.mxu0 %v322
  %398 = vmatprep.subr.bf16.mxu0 0
  %399 = vmatpush1.bf16.msra.mxu0 %v323
  %400 = vmatprep.subr.bf16.mxu0 0
  %401 = vmatpush1.bf16.msra.mxu0 %v324
  %402 = vmatprep.subr.bf16.mxu0 0
  %403 = vmatpush1.bf16.msra.mxu0 %v325
  %404 = vmatprep.subr.bf16.mxu0 0
  %405 = vmatpush1.bf16.msra.mxu0 %v326
  %406 = vmatprep.subr.bf16.mxu0 0
  %407 = vmatpush1.bf16.msra.mxu0 %v327
  %408 = vmatprep.mubr.bf16.mxu0 %v153
  %409 = vmatmul.mubr.bf16.gmra.mrb[0].mxu0 %v152
  %v410 = vpop.f32.mrb[0].mxu0
  %v411 = vadd.f32 0.0, %v410
  %v412 = vpop.f32.mrb[0].mxu0
  %v413 = vpop.f32.mrb[0].mxu0
  %v414 = vadd.f32 0.0, %v413
  %v415 = vpop.f32.mrb[0].mxu0
  %416 = vmatprep.mubr.bf16.mxu0 %v157
  %417 = vmatmul.mubr.bf16.gmra.mrb[0].mxu0 %v156
  %v418 = vpop.f32.mrb[0].mxu0
  %v419 = vadd.f32 0.0, %v418
  %v420 = vpop.f32.mrb[0].mxu0
  %v421 = vpop.f32.mrb[0].mxu0
  %v422 = vadd.f32 0.0, %v421
  %v423 = vpop.f32.mrb[0].mxu0
  %424 = vmatprep.mubr.bf16.mxu0 %v161
  %425 = vmatmul.mubr.bf16.gmra.mrb[0].mxu0 %v160
  %v426 = vpop.f32.mrb[0].mxu0
  %v427 = vadd.f32 0.0, %v426
  %v428 = vpop.f32.mrb[0].mxu0
  %v429 = vpop.f32.mrb[0].mxu0
  %v430 = vadd.f32 0.0, %v429
  %v431 = vpop.f32.mrb[0].mxu0
  %432 = vmatprep.mubr.bf16.mxu0 %v165
  %433 = vmatmul.mubr.bf16.gmra.mrb[0].mxu0 %v164
  %v434 = vpop.f32.mrb[0].mxu0
  %v435 = vadd.f32 0.0, %v434
  %v436 = vpop.f32.mrb[0].mxu0
  %v437 = vpop.f32.mrb[0].mxu0
  %v438 = vadd.f32 0.0, %v437
  %v439 = vpop.f32.mrb[0].mxu0
  %440 = vdwg.mxu0
  %441 = vmatprep.subr.bf16.mxu0 0
  %442 = vmatpush1.bf16.msra.mxu0 %v328
  %443 = vmatprep.subr.bf16.mxu0 0
  %444 = vmatpush1.bf16.msra.mxu0 %v329
  %445 = vmatprep.subr.bf16.mxu0 0
  %446 = vmatpush1.bf16.msra.mxu0 %v330
  %447 = vmatprep.subr.bf16.mxu0 0
  %448 = vmatpush1.bf16.msra.mxu0 %v331
  %449 = vmatprep.subr.bf16.mxu0 0
  %450 = vmatpush1.bf16.msra.mxu0 %v332
  %451 = vmatprep.subr.bf16.mxu0 0
  %452 = vmatpush1.bf16.msra.mxu0 %v333
  %453 = vmatprep.subr.bf16.mxu0 0
  %454 = vmatpush1.bf16.msra.mxu0 %v334
  %455 = vmatprep.subr.bf16.mxu0 0
  %456 = vmatpush1.bf16.msra.mxu0 %v335
  %457 = vmatprep.subr.bf16.mxu0 0
  %458 = vmatpush1.bf16.msra.mxu0 %v336
  %459 = vmatprep.subr.bf16.mxu0 0
  %460 = vmatpush1.bf16.msra.mxu0 %v337
  %461 = vmatprep.subr.bf16.mxu0 0
  %462 = vmatpush1.bf16.msra.mxu0 %v338
  %463 = vmatprep.subr.bf16.mxu0 0
  %464 = vmatpush1.bf16.msra.mxu0 %v339
  %465 = vmatprep.subr.bf16.mxu0 0
  %466 = vmatpush1.bf16.msra.mxu0 %v340
  %467 = vmatprep.subr.bf16.mxu0 0
  %468 = vmatpush1.bf16.msra.mxu0 %v341
  %469 = vmatprep.subr.bf16.mxu0 0
  %470 = vmatpush1.bf16.msra.mxu0 %v342
  %471 = vmatprep.subr.bf16.mxu0 0
  %472 = vmatpush1.bf16.msra.mxu0 %v343
  %473 = vmatprep.mubr.bf16.mxu0 %v155
  %474 = vmatmul.mubr.bf16.gmra.mrb[0].mxu0 %v154
  %v475 = vpop.f32.mrb[0].mxu0
  %v476 = vadd.f32 %v411, %v475
  %v477 = vpop.f32.mrb[0].mxu0
  %v478 = vpop.f32.mrb[0].mxu0
  %v479 = vadd.f32 %v414, %v478
  %v480 = vpop.f32.mrb[0].mxu0
  %481 = vmatprep.mubr.bf16.mxu0 %v159
  %482 = vmatmul.mubr.bf16.gmra.mrb[0].mxu0 %v158
  %v483 = vpop.f32.mrb[0].mxu0
  %v484 = vadd.f32 %v419, %v483
  %v485 = vpop.f32.mrb[0].mxu0
  %v486 = vpop.f32.mrb[0].mxu0
  %v487 = vadd.f32 %v422, %v486
  %v488 = vpop.f32.mrb[0].mxu0
  %489 = vmatprep.mubr.bf16.mxu0 %v163
  %490 = vmatmul.mubr.bf16.gmra.mrb[0].mxu0 %v162
  %v491 = vpop.f32.mrb[0].mxu0
  %v492 = vadd.f32 %v427, %v491
  %v493 = vpop.f32.mrb[0].mxu0
  %v494 = vpop.f32.mrb[0].mxu0
  %v495 = vadd.f32 %v430, %v494
  %v496 = vpop.f32.mrb[0].mxu0
  %497 = vmatprep.mubr.bf16.mxu0 %v167
  %498 = vmatmul.mubr.bf16.gmra.mrb[0].mxu0 %v166
  %v499 = vpop.f32.mrb[0].mxu0
  %v500 = vadd.f32 %v435, %v499
  %v501 = vpop.f32.mrb[0].mxu0
  %v502 = vpop.f32.mrb[0].mxu0
  %v503 = vadd.f32 %v438, %v502
  %v504 = vpop.f32.mrb[0].mxu0
  %505 = vdwg.mxu0
  %vm506 = vcmask 261120
  %v507 = vsel %vm506, %v476, 0.0
  %508 = vadd.xlane.f32.xlu0 %v507
  %v509 = vpop.xlane.xlu0 %508
  %v510 = vsel %vm506, %v479, 0.0
  %511 = vadd.xlane.f32.xlu0 %v510
  %v512 = vpop.xlane.xlu0 %511
  %v513 = vsel %vm506, %v484, 0.0
  %514 = vadd.xlane.f32.xlu0 %v513
  %v515 = vpop.xlane.xlu0 %514
  %v516 = vsel %vm506, %v487, 0.0
  %517 = vadd.xlane.f32.xlu0 %v516
  %v518 = vpop.xlane.xlu0 %517
  %v519 = vsel %vm506, %v492, 0.0
  %520 = vadd.xlane.f32.xlu0 %v519
  %v521 = vpop.xlane.xlu0 %520
  %v522 = vsel %vm506, %v495, 0.0
  %523 = vadd.xlane.f32.xlu0 %v522
  %v524 = vpop.xlane.xlu0 %523
  %v525 = vsel %vm506, %v500, 0.0
  %526 = vadd.xlane.f32.xlu0 %v525
  %v527 = vpop.xlane.xlu0 %526
  %v528 = vsel %vm506, %v503, 0.0
  %529 = vadd.xlane.f32.xlu0 %v528
  %v530 = vpop.xlane.xlu0 %529
  %v531 = vrcp.pop 32.0
  %v532 = vmul.f32 %v509, %v531
  %v533 = vmul.f32 %v512, %v531
  %v534 = vmul.f32 %v515, %v531
  %v535 = vmul.f32 %v518, %v531
  %v536 = vmul.f32 %v521, %v531
  %v537 = vmul.f32 %v524, %v531
  %v538 = vmul.f32 %v527, %v531
  %v539 = vmul.f32 %v530, %v531
  %v540 = vsub.f32 %v476, %v532
  %v541 = vsub.f32 %v479, %v533
  %v542 = vsub.f32 %v484, %v534
  %v543 = vsub.f32 %v487, %v535
  %v544 = vsub.f32 %v492, %v536
  %v545 = vsub.f32 %v495, %v537
  %v546 = vsub.f32 %v500, %v538
  %v547 = vsub.f32 %v503, %v539
  %v548 = vmul.f32 %v540, %v540
  %v549 = vmul.f32 %v541, %v541
  %v550 = vmul.f32 %v542, %v542
  %v551 = vmul.f32 %v543, %v543
  %v552 = vmul.f32 %v544, %v544
  %v553 = vmul.f32 %v545, %v545
  %v554 = vmul.f32 %v546, %v546
  %v555 = vmul.f32 %v547, %v547
  %v556 = vsel %vm506, %v548, 0.0
  %557 = vadd.xlane.f32.xlu0 %v556
  %v558 = vpop.xlane.xlu0 %557
  %v559 = vsel %vm506, %v549, 0.0
  %560 = vadd.xlane.f32.xlu0 %v559
  %v561 = vpop.xlane.xlu0 %560
  %v562 = vsel %vm506, %v550, 0.0
  %563 = vadd.xlane.f32.xlu0 %v562
  %v564 = vpop.xlane.xlu0 %563
  %v565 = vsel %vm506, %v551, 0.0
  %566 = vadd.xlane.f32.xlu0 %v565
  %v567 = vpop.xlane.xlu0 %566
  %v568 = vsel %vm506, %v552, 0.0
  %569 = vadd.xlane.f32.xlu0 %v568
  %v570 = vpop.xlane.xlu0 %569
  %v571 = vsel %vm506, %v553, 0.0
  %572 = vadd.xlane.f32.xlu0 %v571
  %v573 = vpop.xlane.xlu0 %572
  %v574 = vsel %vm506, %v554, 0.0
  %575 = vadd.xlane.f32.xlu0 %v574
  %v576 = vpop.xlane.xlu0 %575
  %v577 = vsel %vm506, %v555, 0.0
  %578 = vadd.xlane.f32.xlu0 %v577
  %v579 = vpop.xlane.xlu0 %578
  %v580 = vmul.f32 %v558, %v531
  %v581 = vmul.f32 %v561, %v531
  %v582 = vmul.f32 %v564, %v531
  %v583 = vmul.f32 %v567, %v531
  %v584 = vmul.f32 %v570, %v531
  %v585 = vmul.f32 %v573, %v531
  %v586 = vmul.f32 %v576, %v531
  %v587 = vmul.f32 %v579, %v531
  %v588 = vadd.f32 %v580, 1e-05
  %v589 = vadd.f32 %v581, 1e-05
  %v590 = vadd.f32 %v582, 1e-05
  %v591 = vadd.f32 %v583, 1e-05
  %v592 = vadd.f32 %v584, 1e-05
  %v593 = vadd.f32 %v585, 1e-05
  %v594 = vadd.f32 %v586, 1e-05
  %v595 = vadd.f32 %v587, 1e-05
  %v596 = vrsqrt.pop %v588
  %v597 = vrsqrt.pop %v589
  %v598 = vrsqrt.pop %v590
  %v599 = vrsqrt.pop %v591
  %v600 = vrsqrt.pop %v592
  %v601 = vrsqrt.pop %v593
  %v602 = vrsqrt.pop %v594
  %v603 = vrsqrt.pop %v595
  %v604 = vmul.f32 %v540, %v596
  %v605 = vmul.f32 %v541, %v597
  %v606 = vmul.f32 %v542, %v598
  %v607 = vmul.f32 %v543, %v599
  %v608 = vmul.f32 %v544, %v600
  %v609 = vmul.f32 %v545, %v601
  %v610 = vmul.f32 %v546, %v602
  %v611 = vmul.f32 %v547, %v603
  %v612 = vld [vmem:[%s2] sm:$0xff]
  %v613 = vld [vmem:[%s2 + $0x8] sm:$0xff]
  %v614 = vld [vmem:[%s2 + $0x10] sm:$0xff]
  %v615 = vld [vmem:[%s2 + $0x18] sm:$0xff]
  %v616 = vld [vmem:[%s2 + $0x20] sm:$0xff]
  %v617 = vld [vmem:[%s2 + $0x28] sm:$0xff]
  %v618 = vld [vmem:[%s2 + $0x30] sm:$0xff]
  %v619 = vld [vmem:[%s2 + $0x38] sm:$0xff]
  %621 = vset.pattern.permute.xlu0 0
  %622 = vperm.xlu0 %621, %v612
  %v623 = vpop.permute.xlu0 %622
  %626 = vset.pattern.permute.xlu0 0
  %627 = vperm.xlu0 %626, %v613
  %v628 = vpop.permute.xlu0 %627
  %631 = vset.pattern.permute.xlu0 0
  %632 = vperm.xlu0 %631, %v614
  %v633 = vpop.permute.xlu0 %632
  %636 = vset.pattern.permute.xlu0 0
  %637 = vperm.xlu0 %636, %v615
  %v638 = vpop.permute.xlu0 %637
  %641 = vset.pattern.permute.xlu0 0
  %642 = vperm.xlu0 %641, %v616
  %v643 = vpop.permute.xlu0 %642
  %646 = vset.pattern.permute.xlu0 0
  %647 = vperm.xlu0 %646, %v617
  %v648 = vpop.permute.xlu0 %647
  %651 = vset.pattern.permute.xlu0 0
  %652 = vperm.xlu0 %651, %v618
  %v653 = vpop.permute.xlu0 %652
  %656 = vset.pattern.permute.xlu0 0
  %657 = vperm.xlu0 %656, %v619
  %v658 = vpop.permute.xlu0 %657
  %v660 = vmul.f32 %v604, %v623
  %v661 = vmul.f32 %v605, %v628
  %v662 = vmul.f32 %v606, %v633
  %v663 = vmul.f32 %v607, %v638
  %v664 = vmul.f32 %v608, %v643
  %v665 = vmul.f32 %v609, %v648
  %v666 = vmul.f32 %v610, %v653
  %v667 = vmul.f32 %v611, %v658
  %v668 = vld [vmem:[%s3] sm:$0xff]
  %v669 = vld [vmem:[%s3 + $0x8] sm:$0xff]
  %v670 = vld [vmem:[%s3 + $0x10] sm:$0xff]
  %v671 = vld [vmem:[%s3 + $0x18] sm:$0xff]
  %v672 = vld [vmem:[%s3 + $0x20] sm:$0xff]
  %v673 = vld [vmem:[%s3 + $0x28] sm:$0xff]
  %v674 = vld [vmem:[%s3 + $0x30] sm:$0xff]
  %v675 = vld [vmem:[%s3 + $0x38] sm:$0xff]
  %677 = vset.pattern.permute.xlu0 0
  %678 = vperm.xlu0 %677, %v668
  %v679 = vpop.permute.xlu0 %678
  %682 = vset.pattern.permute.xlu0 0
  %683 = vperm.xlu0 %682, %v669
  %v684 = vpop.permute.xlu0 %683
  %687 = vset.pattern.permute.xlu0 0
  %688 = vperm.xlu0 %687, %v670
  %v689 = vpop.permute.xlu0 %688
  %692 = vset.pattern.permute.xlu0 0
  %693 = vperm.xlu0 %692, %v671
  %v694 = vpop.permute.xlu0 %693
  %697 = vset.pattern.permute.xlu0 0
  %698 = vperm.xlu0 %697, %v672
  %v699 = vpop.permute.xlu0 %698
  %702 = vset.pattern.permute.xlu0 0
  %703 = vperm.xlu0 %702, %v673
  %v704 = vpop.permute.xlu0 %703
  %707 = vset.pattern.permute.xlu0 0
  %708 = vperm.xlu0 %707, %v674
  %v709 = vpop.permute.xlu0 %708
  %712 = vset.pattern.permute.xlu0 0
  %713 = vperm.xlu0 %712, %v675
  %v714 = vpop.permute.xlu0 %713
  %v716 = vadd.f32 %v660, %v679
  %v717 = vadd.f32 %v661, %v684
  %v718 = vadd.f32 %v662, %v689
  %v719 = vadd.f32 %v663, %v694
  %v720 = vadd.f32 %v664, %v699
  %v721 = vadd.f32 %v665, %v704
  %v722 = vadd.f32 %v666, %v709
  %v723 = vadd.f32 %v667, %v714
  %vm724 = vcmp.gt.f32.partialorder %v716, 0.0
  %vm725 = vcmp.gt.f32.partialorder %v717, 0.0
  %vm726 = vcmp.gt.f32.partialorder %v718, 0.0
  %vm727 = vcmp.gt.f32.partialorder %v719, 0.0
  %vm728 = vcmp.gt.f32.partialorder %v720, 0.0
  %vm729 = vcmp.gt.f32.partialorder %v721, 0.0
  %vm730 = vcmp.gt.f32.partialorder %v722, 0.0
  %vm731 = vcmp.gt.f32.partialorder %v723, 0.0
  %v732 = vmul.f32 %v716, 0.2
  %v733 = vmul.f32 %v717, 0.2
  %v734 = vmul.f32 %v718, 0.2
  %v735 = vmul.f32 %v719, 0.2
  %v736 = vmul.f32 %v720, 0.2
  %v737 = vmul.f32 %v721, 0.2
  %v738 = vmul.f32 %v722, 0.2
  %v739 = vmul.f32 %v723, 0.2
  %v740 = vsel %vm724, %v716, %v732
  %v741 = vsel %vm725, %v717, %v733
  %v742 = vsel %vm726, %v718, %v734
  %v743 = vsel %vm727, %v719, %v735
  %v744 = vsel %vm728, %v720, %v736
  %v745 = vsel %vm729, %v721, %v737
  %v746 = vsel %vm730, %v722, %v738
  %v747 = vsel %vm731, %v723, %v739
  %v748 = vld [vmem:[%s4] sm:$0xff]
  %v749 = vld [vmem:[%s4 + $0x8] sm:$0xff]
  %v750 = vld [vmem:[%s4 + $0x10] sm:$0xff]
  %v751 = vld [vmem:[%s4 + $0x18] sm:$0xff]
  %v752 = vld [vmem:[%s4 + $0x20] sm:$0xff]
  %v753 = vld [vmem:[%s4 + $0x28] sm:$0xff]
  %v754 = vld [vmem:[%s4 + $0x30] sm:$0xff]
  %v755 = vld [vmem:[%s4 + $0x38] sm:$0xff]
  %v756 = vmul.f32 %v740, %v748
  %v757 = vmul.f32 %v741, %v749
  %v758 = vmul.f32 %v742, %v750
  %v759 = vmul.f32 %v743, %v751
  %v760 = vmul.f32 %v744, %v752
  %v761 = vmul.f32 %v745, %v753
  %v762 = vmul.f32 %v746, %v754
  %v763 = vmul.f32 %v747, %v755
  %v764 = vsel %vm506, %v756, 0.0
  %v765 = vsel %vm506, %v757, 0.0
  %v766 = vadd.f32 %v764, %v765
  %v767 = vsel %vm506, %v758, 0.0
  %v768 = vadd.f32 %v766, %v767
  %v769 = vsel %vm506, %v759, 0.0
  %v770 = vadd.f32 %v768, %v769
  %v771 = vsel %vm506, %v760, 0.0
  %v772 = vadd.f32 %v770, %v771
  %v773 = vsel %vm506, %v761, 0.0
  %v774 = vadd.f32 %v772, %v773
  %v775 = vsel %vm506, %v762, 0.0
  %v776 = vadd.f32 %v774, %v775
  %v777 = vsel %vm506, %v763, 0.0
  %v778 = vadd.f32 %v776, %v777
  %v779 = vrot.slane %v778, 4
  %v780 = vadd.f32 %v778, %v779
  %v781 = vrot.slane %v780, 2
  %v782 = vadd.f32 %v780, %v781
  %v783 = vrot.slane %v782, 1
  %v784 = vadd.f32 %v782, %v783
  %v785 = vld [vmem:[%s5] sm:$0x3]
  %v786 = vmul.f32 %v785, %v784
  %vm787 = vcmask 254976
  %v788 = vsel %vm787, %v786, 0.0
  %789 = vadd.xlane.f32.xlu0 %v788
  %v790 = vpop.xlane.xlu0 %789
  %v791 = vxor.u32 %v790, 2147483648
  %v792 = vmul.f32 %v791, 1.442695
  %v793 = vpow.pop %v792
  %v794 = vadd.f32 %v793, 1.0
  %v795 = vrcp.pop %v794
  %v796 = vmul.f32 1.0, %v795
  %vm797 = vcmask 1024
  %798 = vst.msk [vmem:[%s6] sm:$0x3] %vm797, %v796
  // Predicated region
  $region26: #{discriminator_forward.7} parent=0 // pred_check
    _
  $region27: #{discriminator_forward.7} parent=0 // pred_check_branch
    %800 = sbr.rel (0) target = $region29
  $region28: #{discriminator_forward.7} parent=0 // pred_region
    _
  $region29: #{discriminator_forward.7} parent=0 // pred_fallthru
    _
  // Predicated region
  $region30: #{discriminator_forward.7} parent=0 // pred_check
    _
  $region31: #{discriminator_forward.7} parent=0 // pred_check_branch
    %802 = sbr.rel (0) target = $region33
  $region32: #{discriminator_forward.7} parent=0 // pred_region
    _
  $region33: #{discriminator_forward.7} parent=0 // pred_fallthru
    _

</llo_original>
